<compile_context>
chip_gen: v7x
topology: tpu7x:2x2x1
jax: 0.10.0
libtpu: 0.0.40
codegen_flags: <defaults>
</compile_context>

<pallas_src>
import functools

import jax
import jax.numpy as jnp
from jax.experimental import pallas as pl
from jax.experimental.pallas import tpu as pltpu


def mha_block_kernel(x_ref, consts_ref, wqkv_ref, wo_ref, out_ref, *,
                     n_heads, eps, matmul_dtype, exp_dtype, kv_block):
    NB, L, E = x_ref.shape
    H = n_heads
    D = E // H
    R = NB * L              # rows in this batch tile
    B = NB * H              # merged (batch, head) attention batch
    n_kv = L // kv_block

    # Batch-major block -> seq-major rows (l, n) so the head split below is a
    # pure reshape; only cheap (1,0,2)-style permutes are used in this kernel.
    x = x_ref[...]                                    # (NB, L, E), f32
    xs = pltpu.einshape("nle->lne", x)                # (L, NB, E)
    xr = xs.reshape(R, E)                             # rows ordered (l, n)

    c = consts_ref[...]                               # (6, E) fused constants
    gamma, beta = c[0], c[1]
    b_q, b_k, b_v, b_o = c[2], c[3], c[4], c[5]

    # ---- LayerNorm over features (f32 elementwise) ----
    mean = jnp.mean(xr, axis=-1, keepdims=True)
    cen = xr - mean
    var = jnp.mean(cen * cen, axis=-1, keepdims=True)
    xn = cen * jax.lax.rsqrt(var + eps) * gamma + beta          # (R, E)

    # ---- packed QKV projection: one MXU matmul over all rows ----
    # (weights already live in matmul_dtype -- cast once in the wrapper)
    qkv = jnp.dot(xn.astype(matmul_dtype), wqkv_ref[...],
                  preferred_element_type=jnp.float32)           # (R, 3E)

    scale = 1.0 / float(D) ** 0.5
    q = (qkv[:, 0 * E:1 * E] + b_q) * scale
    k = qkv[:, 1 * E:2 * E] + b_k
    v = qkv[:, 2 * E:3 * E] + b_v

    # rows (l, n) x features (h, d)  ->  (b = n*H + h, l, d)
    def to_bld(t):
        t = t.reshape(L, B, D)                        # pure reshape ((l,n,h,d))
        return pltpu.einshape("lbd->bld", t).astype(matmul_dtype)

    qb, kb, vb = to_bld(q), to_bld(k), to_bld(v)

    # ---- Flash-style K-blocked attention with online softmax --------------
    # Only one (B, L, kv_block) score/prob tile is live at a time; running
    # max / sum / output accumulators stay resident across the static KV loop.
    # TODO(synk): for very long L, stream KV blocks through a grid axis or a
    # fori_loop with VMEM-scratch accumulators instead of a static unroll.
    def kv_tile(j):
        kj = kb[:, j * kv_block:(j + 1) * kv_block, :]
        vj = vb[:, j * kv_block:(j + 1) * kv_block, :]
        s = jnp.einsum("bqd,bkd->bqk", qb, kj,
                       preferred_element_type=jnp.float32)      # (B, L, kv)
        return s, vj

    # exp() may run in bf16 on v6e/v7x (pass exp_dtype=jnp.bfloat16) to relieve
    # the single-issue EUP; keep the f32 default on v5e (no bf16 EUP).
    def p_of(s, m):
        return jnp.exp((s - m).astype(exp_dtype)).astype(jnp.float32)

    s, vj = kv_tile(0)
    m_i = jnp.max(s, axis=-1, keepdims=True)                    # (B, L, 1)
    p = p_of(s, m_i)
    l_i = jnp.sum(p, axis=-1, keepdims=True)
    acc = jnp.einsum("bqk,bkd->bqd", p.astype(matmul_dtype), vj,
                     preferred_element_type=jnp.float32)        # (B, L, D)
    for j in range(1, n_kv):
        s, vj = kv_tile(j)
        m_new = jnp.maximum(m_i, jnp.max(s, axis=-1, keepdims=True))
        alpha = jnp.exp(m_i - m_new)
        p = p_of(s, m_new)
        l_i = alpha * l_i + jnp.sum(p, axis=-1, keepdims=True)
        acc = alpha * acc + jnp.einsum("bqk,bkd->bqd", p.astype(matmul_dtype),
                                       vj, preferred_element_type=jnp.float32)
        m_i = m_new

    # EUP approx reciprocal + one Newton step: ~f32 accuracy, VALU stays free.
    r = pl.reciprocal(l_i, approx=True)
    r = r * (2.0 - l_i * r)
    o = acc * r                                                 # (B, L, D)

    o = pltpu.einshape("bld->lbd", o).reshape(R, E)             # rows (l, n)

    # ---- output projection (+ bias) and residual ----
    y = jnp.dot(o.astype(matmul_dtype), wo_ref[...],
                preferred_element_type=jnp.float32) + b_o       # (R, E)
    y = (y + xr).reshape(L, NB, E)
    out_ref[...] = pltpu.einshape("lne->nle", y).astype(out_ref.dtype)


def _vmem_limit_bytes(L, NB, E, H, kv_block, mm_bytes):
    """Rough per-step VMEM working-set estimate (2x margin), clamped to
    [32 MiB, 64 MiB] so it is legal on every generation (v7x: 64 MiB/TC)."""
    f32 = 4
    R, B, D = NB * L, NB * H, E // H
    io = 2 * (2 * R * E * f32)                       # x + out blocks, double-buffered
    wgt = 2 * (6 * E * f32 + 4 * E * E * mm_bytes)   # consts + Wqkv^T + Wo^T, double-buffered
    act = (3 * R * E * f32                           # qkv
           + 3 * B * L * D * mm_bytes                # q / k / v head-major
           + 2 * B * L * kv_block * f32              # score + prob tile
           + B * L * D * f32                         # attention accumulator
           + 3 * R * E * f32)                        # xn / o / y temporaries
    est = 2 * (io + wgt + act)
    return int(min(max(est, 32 * 1024 * 1024), 64 * 1024 * 1024))


def mha_block(x_lne, params, n_heads, *, eps=1e-5, matmul_dtype=jnp.bfloat16,
              exp_dtype=jnp.float32, kv_block=128, batch_tiles=None):
    """MHABlock forward: X + MHA(LN(X)).  x_lne is (L, N, E) seq-major
    (PyTorch nn.MultiheadAttention default layout)."""
    L, N, E = x_lne.shape
    if E % n_heads != 0:
        raise ValueError("embed_dim must be divisible by num_heads")
    kv_block = min(kv_block, L)
    if L % kv_block != 0:
        raise ValueError("seq_len must be divisible by kv_block")
    if batch_tiles is None:
        # >=2 "parallel" grid steps keep both v7x TensorCores busy; the extra
        # ~0.35 us/step is negligible on 1-TC v5e/v6e, and the smaller batch
        # tile also halves per-step VMEM at large shapes.
        batch_tiles = 2 if (N >= 2 and N % 2 == 0) else 1
    if N % batch_tiles != 0:
        raise ValueError("batch must be divisible by batch_tiles")
    NB = N // batch_tiles

    # One-time parameter prep (do at load time in production): transpose for
    # right-multiplication and cast to the MXU input dtype, so no per-step
    # weight casts or f32 weight DMAs happen inside the kernel.
    wqkv_t = params["in_proj_weight"].T.astype(matmul_dtype)     # (E, 3E)
    wo_t = params["out_proj_weight"].T.astype(matmul_dtype)      # (E, E)
    consts = jnp.concatenate(
        [params["ln_gamma"].reshape(1, E),
         params["ln_beta"].reshape(1, E),
         params["in_proj_bias"].reshape(3, E),                   # b_q, b_k, b_v
         params["out_proj_bias"].reshape(1, E)],
        axis=0).astype(jnp.float32)                              # (6, E)

    # Batch-major layout so a batch tile always keeps the full (L, E) as its
    # last two block dims (legal for any NB).  Callers that can produce
    # batch-major activations directly avoid this transpose entirely.
    x_nle = jnp.transpose(x_lne, (1, 0, 2))

    kern = functools.partial(
        mha_block_kernel, n_heads=n_heads, eps=eps, matmul_dtype=matmul_dtype,
        exp_dtype=exp_dtype, kv_block=kv_block)

    # TODO(synk): at production E, single-buffer the constant-index operands
    # (consts / W_qkv^T / W_out^T) via pipeline_mode to halve their VMEM
    # footprint; irrelevant at E=32 so left at the default here.
    # TODO(synk): at production widths keep E / head_dim multiples of 128 for
    # lane-dense stores and full MXU K-utilization; an fp8 projection path is
    # a further v7x-only option.
    out_nle = pl.pallas_call(
        kern,
        out_shape=jax.ShapeDtypeStruct((N, L, E), x_lne.dtype),
        grid_spec=pltpu.PrefetchScalarGridSpec(
            num_scalar_prefetch=0,
            grid=(batch_tiles,),
            in_specs=[
                pl.BlockSpec((NB, L, E), lambda i: (i, 0, 0)),   # x (batch-major)
                pl.BlockSpec((6, E), lambda i: (0, 0)),          # fused constants
                pl.BlockSpec((E, 3 * E), lambda i: (0, 0)),      # W_qkv^T
                pl.BlockSpec((E, E), lambda i: (0, 0)),          # W_out^T
            ],
            out_specs=pl.BlockSpec((NB, L, E), lambda i: (i, 0, 0)),
        ),
        input_output_aliases={0: 0},      # in-place residual update
        compiler_params=pltpu.CompilerParams(
            dimension_semantics=("parallel",),
            vmem_limit_bytes=_vmem_limit_bytes(
                L, NB, E, n_heads, kv_block, jnp.dtype(matmul_dtype).itemsize)),
    )(x_nle, consts, wqkv_t, wo_t)

    return jnp.transpose(out_nle, (1, 0, 2))


def mha_block_ref(x_lne, params, n_heads, eps=1e-5):
    """Pure-JAX reference of the same semantics, for verification."""
    L, N, E = x_lne.shape
    D = E // n_heads
    g, b = params["ln_gamma"], params["ln_beta"]
    mean = jnp.mean(x_lne, axis=-1, keepdims=True)
    var = jnp.mean((x_lne - mean) ** 2, axis=-1, keepdims=True)
    xn = (x_lne - mean) / jnp.sqrt(var + eps) * g + b
    qkv = xn @ params["in_proj_weight"].T + params["in_proj_bias"]
    q, k, v = qkv[..., :E], qkv[..., E:2 * E], qkv[..., 2 * E:]

    def split(t):  # (L, N, E) -> (N, H, L, D)
        return jnp.transpose(t.reshape(L, N, n_heads, D), (1, 2, 0, 3))

    qh, kh, vh = split(q), split(k), split(v)
    s = jnp.einsum("nhld,nhmd->nhlm", qh, kh) / jnp.sqrt(D)
    p = jax.nn.softmax(s, axis=-1)
    o = jnp.einsum("nhlm,nhmd->nhld", p, vh)        # (N, H, L, D)
    o = jnp.transpose(o, (2, 0, 1, 3)).reshape(L, N, E)
    y = o @ params["out_proj_weight"].T + params["out_proj_bias"]
    return y + x_lne


if __name__ == "__main__":
    n_filters, n_heads = 32, 4
    seq_len, batch = 8, 2

    key = jax.random.PRNGKey(0)
    k_x, k_g, k_b, k_w, k_wb, k_o, k_ob = jax.random.split(key, 7)

    x = jax.random.normal(k_x, (seq_len, batch, n_filters), dtype=jnp.float32)

    params = {
        "ln_gamma": 1.0 + 0.1 * jax.random.normal(k_g, (n_filters,), jnp.float32),
        "ln_beta": 0.1 * jax.random.normal(k_b, (n_filters,), jnp.float32),
        "in_proj_weight": 0.2 * jax.random.normal(
            k_w, (3 * n_filters, n_filters), jnp.float32),
        "in_proj_bias": 0.05 * jax.random.normal(
            k_wb, (3 * n_filters,), jnp.float32),
        "out_proj_weight": 0.2 * jax.random.normal(
            k_o, (n_filters, n_filters), jnp.float32),
        "out_proj_bias": 0.05 * jax.random.normal(
            k_ob, (n_filters,), jnp.float32),
    }

    ref = mha_block_ref(x, params, n_heads)

    # f32 MXU path, default batch tiling (grid=(2,), "parallel").
    f32_fwd = jax.jit(functools.partial(mha_block, n_heads=n_heads,
                                        matmul_dtype=jnp.float32))
    out = jax.block_until_ready(f32_fwd(x, params))
    assert out.shape == x.shape
    assert jnp.allclose(out, ref, atol=2e-3, rtol=2e-3), "f32 mismatch vs reference"

    # Multi-tile flash-KV path (kv_block=4 -> 2 online-softmax KV blocks).
    f32_kv_fwd = jax.jit(functools.partial(mha_block, n_heads=n_heads,
                                           matmul_dtype=jnp.float32, kv_block=4))
    out_kv = jax.block_until_ready(f32_kv_fwd(x, params))
    assert jnp.allclose(out_kv, ref, atol=2e-3, rtol=2e-3), "flash-KV mismatch"

    # Single whole-batch grid step (v5e/v6e-style) must also match.
    f32_one = jax.jit(functools.partial(mha_block, n_heads=n_heads,
                                        matmul_dtype=jnp.float32, batch_tiles=1))
    out_one = jax.block_until_ready(f32_one(x, params))
    assert jnp.allclose(out_one, ref, atol=2e-3, rtol=2e-3), "batch_tiles=1 mismatch"

    # Default path: bf16 MXU inputs with f32 accumulation (all generations).
    bf16_fwd = jax.jit(functools.partial(mha_block, n_heads=n_heads))
    out_bf16 = jax.block_until_ready(bf16_fwd(x, params))
    assert jnp.allclose(out_bf16, ref, atol=5e-2, rtol=5e-2), "bf16 mismatch vs reference"

    print("KERNEL_OK")
</pallas_src>

<mosaic_0001>
module attributes {stable_mosaic.version = 11 : i64} {
  func.func @mha_block_kernel(%arg0: i32, %arg1: memref<1x8x32xf32, #tpu.memory_space<vmem>>, %arg2: memref<6x32xf32, #tpu.memory_space<vmem>>, %arg3: memref<32x96xf32, #tpu.memory_space<vmem>>, %arg4: memref<32x32xf32, #tpu.memory_space<vmem>>, %arg5: memref<1x8x32xf32, #tpu.memory_space<vmem>>) attributes {dimension_semantics = [#tpu.dimension_semantics<parallel>], iteration_bounds = array<i64: 2>, scalar_prefetch = 0 : i64, scratch_operands = 0 : i64, tpu.core_type = #tpu.core_type<tc>, window_params = [{transform_indices = @transform_0, window_bounds = array<i64: 1, 8, 32>}, {pipeline_mode = #tpu.pipeline_mode<synchronous>, transform_indices = @transform_1, window_bounds = array<i64: 6, 32>}, {pipeline_mode = #tpu.pipeline_mode<synchronous>, transform_indices = @transform_2, window_bounds = array<i64: 32, 96>}, {pipeline_mode = #tpu.pipeline_mode<synchronous>, transform_indices = @transform_3, window_bounds = array<i64: 32, 32>}, {transform_indices = @transform_4, window_bounds = array<i64: 1, 8, 32>}]} {
    %c0 = arith.constant 0 : index
    %c0_0 = arith.constant 0 : index
    %c0_1 = arith.constant 0 : index
    %0 = vector.load %arg1[%c0, %c0_0, %c0_1] : memref<1x8x32xf32, #tpu.memory_space<vmem>>, vector<1x8x32xf32>
    %1 = tpu.transpose %0, [1, 0, 2] : vector<1x8x32xf32> -> vector<8x1x32xf32>
    %2 = vector.shape_cast %1 : vector<8x1x32xf32> to vector<8x32xf32>
    %c0_2 = arith.constant 0 : index
    %c0_3 = arith.constant 0 : index
    %3 = vector.load %arg2[%c0_2, %c0_3] : memref<6x32xf32, #tpu.memory_space<vmem>>, vector<6x32xf32>
    %4 = vector.extract_strided_slice %3 {offsets = [0, 0], sizes = [1, 32], strides = [1, 1]} : vector<6x32xf32> to vector<1x32xf32>
    %5 = vector.shape_cast %4 : vector<1x32xf32> to vector<32xf32>
    %6 = vector.extract_strided_slice %3 {offsets = [1, 0], sizes = [1, 32], strides = [1, 1]} : vector<6x32xf32> to vector<1x32xf32>
    %7 = vector.shape_cast %6 : vector<1x32xf32> to vector<32xf32>
    %8 = vector.extract_strided_slice %3 {offsets = [2, 0], sizes = [1, 32], strides = [1, 1]} : vector<6x32xf32> to vector<1x32xf32>
    %9 = vector.shape_cast %8 : vector<1x32xf32> to vector<32xf32>
    %10 = vector.extract_strided_slice %3 {offsets = [3, 0], sizes = [1, 32], strides = [1, 1]} : vector<6x32xf32> to vector<1x32xf32>
    %11 = vector.shape_cast %10 : vector<1x32xf32> to vector<32xf32>
    %12 = vector.extract_strided_slice %3 {offsets = [4, 0], sizes = [1, 32], strides = [1, 1]} : vector<6x32xf32> to vector<1x32xf32>
    %13 = vector.shape_cast %12 : vector<1x32xf32> to vector<32xf32>
    %14 = vector.extract_strided_slice %3 {offsets = [5, 0], sizes = [1, 32], strides = [1, 1]} : vector<6x32xf32> to vector<1x32xf32>
    %15 = vector.shape_cast %14 : vector<1x32xf32> to vector<32xf32>
    %cst = arith.constant dense<0.000000e+00> : vector<8xf32>
    %16 = vector.multi_reduction <add>, %2, %cst [1] : vector<8x32xf32> to vector<8xf32>
    %17 = vector.shape_cast %16 : vector<8xf32> to vector<8x1xf32>
    %cst_4 = arith.constant 3.200000e+01 : f32
    %18 = vector.broadcast %cst_4 : f32 to vector<8x1xf32>
    %19 = arith.divf %17, %18 : vector<8x1xf32>
    %20 = vector.broadcast %19 : vector<8x1xf32> to vector<8x32xf32>
    %21 = arith.subf %2, %20 : vector<8x32xf32>
    %22 = arith.mulf %21, %21 : vector<8x32xf32>
    %cst_5 = arith.constant dense<0.000000e+00> : vector<8xf32>
    %23 = vector.multi_reduction <add>, %22, %cst_5 [1] : vector<8x32xf32> to vector<8xf32>
    %24 = vector.shape_cast %23 : vector<8xf32> to vector<8x1xf32>
    %cst_6 = arith.constant 3.200000e+01 : f32
    %25 = vector.broadcast %cst_6 : f32 to vector<8x1xf32>
    %26 = arith.divf %24, %25 : vector<8x1xf32>
    %cst_7 = arith.constant 9.99999974E-6 : f32
    %27 = vector.broadcast %cst_7 : f32 to vector<8x1xf32>
    %28 = arith.addf %26, %27 : vector<8x1xf32>
    %29 = math.rsqrt %28 : vector<8x1xf32>
    %30 = vector.broadcast %29 : vector<8x1xf32> to vector<8x32xf32>
    %31 = arith.mulf %21, %30 : vector<8x32xf32>
    %32 = vector.shape_cast %5 : vector<32xf32> to vector<1x32xf32>
    %33 = vector.broadcast %32 : vector<1x32xf32> to vector<8x32xf32>
    %34 = arith.mulf %31, %33 : vector<8x32xf32>
    %35 = vector.shape_cast %7 : vector<32xf32> to vector<1x32xf32>
    %36 = vector.broadcast %35 : vector<1x32xf32> to vector<8x32xf32>
    %37 = arith.addf %34, %36 : vector<8x32xf32>
    %c0_8 = arith.constant 0 : index
    %c0_9 = arith.constant 0 : index
    %38 = vector.load %arg3[%c0_8, %c0_9] : memref<32x96xf32, #tpu.memory_space<vmem>>, vector<32x96xf32>
    %cst_10 = arith.constant dense<0.000000e+00> : vector<8x96xf32>
    %39 = tpu.matmul %37, %38, %cst_10 {dimension_numbers = #tpu.dot_dimension_numbers<[1], [0], [0], [1], [0, 0, 1, 1], [], []>} : vector<8x32xf32>, vector<32x96xf32>, vector<8x96xf32> -> vector<8x96xf32>
    %40 = vector.extract_strided_slice %39 {offsets = [0, 0], sizes = [8, 32], strides = [1, 1]} : vector<8x96xf32> to vector<8x32xf32>
    %41 = vector.shape_cast %9 : vector<32xf32> to vector<1x32xf32>
    %42 = vector.broadcast %41 : vector<1x32xf32> to vector<8x32xf32>
    %43 = arith.addf %40, %42 : vector<8x32xf32>
    %cst_11 = arith.constant 0.353553385 : f32
    %44 = vector.broadcast %cst_11 : f32 to vector<8x32xf32>
    %45 = arith.mulf %43, %44 : vector<8x32xf32>
    %46 = vector.extract_strided_slice %39 {offsets = [0, 32], sizes = [8, 32], strides = [1, 1]} : vector<8x96xf32> to vector<8x32xf32>
    %47 = vector.shape_cast %11 : vector<32xf32> to vector<1x32xf32>
    %48 = vector.broadcast %47 : vector<1x32xf32> to vector<8x32xf32>
    %49 = arith.addf %46, %48 : vector<8x32xf32>
    %50 = vector.extract_strided_slice %39 {offsets = [0, 64], sizes = [8, 32], strides = [1, 1]} : vector<8x96xf32> to vector<8x32xf32>
    %51 = vector.shape_cast %13 : vector<32xf32> to vector<1x32xf32>
    %52 = vector.broadcast %51 : vector<1x32xf32> to vector<8x32xf32>
    %53 = arith.addf %50, %52 : vector<8x32xf32>
    %54 = vector.shape_cast %45 : vector<8x32xf32> to vector<8x4x8xf32>
    %55 = tpu.transpose %54, [1, 0, 2] : vector<8x4x8xf32> -> vector<4x8x8xf32>
    %56 = vector.shape_cast %49 : vector<8x32xf32> to vector<8x4x8xf32>
    %57 = tpu.transpose %56, [1, 0, 2] : vector<8x4x8xf32> -> vector<4x8x8xf32>
    %58 = vector.shape_cast %53 : vector<8x32xf32> to vector<8x4x8xf32>
    %59 = tpu.transpose %58, [1, 0, 2] : vector<8x4x8xf32> -> vector<4x8x8xf32>
    "tpu.trace_start"() <{level = 10 : i32, message = "bqd,bkd->bqk"}> : () -> ()
    %cst_12 = arith.constant dense<0.000000e+00> : vector<4x8x8xf32>
    %60 = tpu.matmul %55, %57, %cst_12 {dimension_numbers = #tpu.dot_dimension_numbers<[2], [2], [1], [1], [0, 0, 0, 1, 1, 1], [0], [0]>} : vector<4x8x8xf32>, vector<4x8x8xf32>, vector<4x8x8xf32> -> vector<4x8x8xf32>
    "tpu.trace_stop"() : () -> ()
    %cst_13 = arith.constant dense<0xFF800000> : vector<4x8xf32>
    %61 = vector.multi_reduction <maximumf>, %60, %cst_13 [2] : vector<4x8x8xf32> to vector<4x8xf32>
    %62 = vector.shape_cast %61 : vector<4x8xf32> to vector<4x8x1xf32>
    %63 = vector.broadcast %62 : vector<4x8x1xf32> to vector<4x8x8xf32>
    %64 = arith.subf %60, %63 : vector<4x8x8xf32>
    %65 = math.exp %64 : vector<4x8x8xf32>
    %cst_14 = arith.constant dense<0.000000e+00> : vector<4x8xf32>
    %66 = vector.multi_reduction <add>, %65, %cst_14 [2] : vector<4x8x8xf32> to vector<4x8xf32>
    %67 = vector.shape_cast %66 : vector<4x8xf32> to vector<4x8x1xf32>
    "tpu.trace_start"() <{level = 10 : i32, message = "bqk,bkd->bqd"}> : () -> ()
    %cst_15 = arith.constant dense<0.000000e+00> : vector<4x8x8xf32>
    %68 = tpu.matmul %65, %59, %cst_15 {dimension_numbers = #tpu.dot_dimension_numbers<[2], [1], [1], [2], [0, 0, 0, 1, 1, 2], [0], [0]>} : vector<4x8x8xf32>, vector<4x8x8xf32>, vector<4x8x8xf32> -> vector<4x8x8xf32>
    "tpu.trace_stop"() : () -> ()
    %69 = tpu.reciprocal %67 {approx = true} : vector<4x8x1xf32> -> vector<4x8x1xf32>
    %70 = arith.mulf %67, %69 : vector<4x8x1xf32>
    %cst_16 = arith.constant 2.000000e+00 : f32
    %71 = vector.broadcast %cst_16 : f32 to vector<4x8x1xf32>
    %72 = arith.subf %71, %70 : vector<4x8x1xf32>
    %73 = arith.mulf %69, %72 : vector<4x8x1xf32>
    %74 = vector.broadcast %73 : vector<4x8x1xf32> to vector<4x8x8xf32>
    %75 = arith.mulf %68, %74 : vector<4x8x8xf32>
    %76 = tpu.transpose %75, [1, 0, 2] : vector<4x8x8xf32> -> vector<8x4x8xf32>
    %77 = vector.shape_cast %76 : vector<8x4x8xf32> to vector<8x32xf32>
    %c0_17 = arith.constant 0 : index
    %c0_18 = arith.constant 0 : index
    %78 = vector.load %arg4[%c0_17, %c0_18] : memref<32x32xf32, #tpu.memory_space<vmem>>, vector<32x32xf32>
    %cst_19 = arith.constant dense<0.000000e+00> : vector<8x32xf32>
    %79 = tpu.matmul %77, %78, %cst_19 {dimension_numbers = #tpu.dot_dimension_numbers<[1], [0], [0], [1], [0, 0, 1, 1], [], []>} : vector<8x32xf32>, vector<32x32xf32>, vector<8x32xf32> -> vector<8x32xf32>
    %80 = vector.shape_cast %15 : vector<32xf32> to vector<1x32xf32>
    %81 = vector.broadcast %80 : vector<1x32xf32> to vector<8x32xf32>
    %82 = arith.addf %79, %81 : vector<8x32xf32>
    %83 = arith.addf %82, %2 : vector<8x32xf32>
    %84 = vector.shape_cast %83 : vector<8x32xf32> to vector<8x1x32xf32>
    %85 = tpu.transpose %84, [1, 0, 2] : vector<8x1x32xf32> -> vector<1x8x32xf32>
    %c0_20 = arith.constant 0 : index
    %c0_21 = arith.constant 0 : index
    %c0_22 = arith.constant 0 : index
    %86 = vector.load %arg5[%c0_20, %c0_21, %c0_22] : memref<1x8x32xf32, #tpu.memory_space<vmem>>, vector<1x8x32xf32>
    tpu.vector_store %arg5[%c0_20, %c0_21, %c0_22], %85 {strides = array<i32>} : memref<1x8x32xf32, #tpu.memory_space<vmem>>, vector<1x8x32xf32>,
    return
  }
  func.func @transform_0(%arg0: i32) -> (i32, i32, i32) {
    %c0_i32 = arith.constant 0 : i32
    %c0_i32_0 = arith.constant 0 : i32
    %c0_i32_1 = arith.constant 0 : i32
    return %arg0, %c0_i32, %c0_i32_0 : i32, i32, i32
  }
  func.func @transform_1(%arg0: i32) -> (i32, i32) {
    %c0_i32 = arith.constant 0 : i32
    %c0_i32_0 = arith.constant 0 : i32
    %c0_i32_1 = arith.constant 0 : i32
    return %c0_i32, %c0_i32_0 : i32, i32
  }
  func.func @transform_2(%arg0: i32) -> (i32, i32) {
    %c0_i32 = arith.constant 0 : i32
    %c0_i32_0 = arith.constant 0 : i32
    %c0_i32_1 = arith.constant 0 : i32
    return %c0_i32, %c0_i32_0 : i32, i32
  }
  func.func @transform_3(%arg0: i32) -> (i32, i32) {
    %c0_i32 = arith.constant 0 : i32
    %c0_i32_0 = arith.constant 0 : i32
    %c0_i32_1 = arith.constant 0 : i32
    return %c0_i32, %c0_i32_0 : i32, i32
  }
  func.func @transform_4(%arg0: i32) -> (i32, i32, i32) {
    %c0_i32 = arith.constant 0 : i32
    %c0_i32_0 = arith.constant 0 : i32
    %c0_i32_1 = arith.constant 0 : i32
    return %arg0, %c0_i32, %c0_i32_0 : i32, i32, i32
  }
}

</mosaic_0001>

<llo_original>
// kernel: mha_block.1
$region0: #{mha_block.1}
  #allocation0 [shape = 'u32[]', space=smem, size = 0x4, offset = 0x4, fixed_abs, tag = 'smem constant byte address 0x4 - core index']
  #allocation1 [shape = 'u32[144,128]{1,0:T(1,128)}', space=vmem, size = 0x12000, scoped, tag = 'internal scratch']
  %s0 = inlined_call_operand.vmem [shape: f32[2,8,32], index: 0, kind: input, shape index: {}, may-alias: {0,4}]
  %s1 = inlined_call_operand.vmem [shape: f32[6,32], index: 1, kind: input, shape index: {}]
  %s2 = inlined_call_operand.vmem [shape: f32[32,96], index: 2, kind: input, shape index: {}]
  %s3 = inlined_call_operand.vmem [shape: f32[32,32], index: 3, kind: input, shape index: {}]
  %s4 = inlined_call_operand.vmem [shape: f32[2,8,32], index: 4, kind: output, shape index: {}, may-alias: {0,4}]
  %s5 = sld [smem:[#allocation0]]
  $region49: #{mha_block.1} parent=0
    _
  %s7 = ssub.s32 1, %s5
  %s8 = scalar_select 0, %s7, %s5
  loop: start=0, step=1, limit=4
  $region2: #{mha_block.1} parent=0 // loop_pre_header
    _
  $region3: #{mha_block.1} parent=0 // loop_header
    %s10 = sphi 0, %s14
    %p11 = scmp.ge.s32.totalorder %s10, 4
    %s20 = sphi 0, %s22
    %s23 = sphi 0, %s20
    %s24 = sphi 0, %s23
    %s40 = sphi 0, %s24
    %s44 = sphi 0, %s44
    %s46 = sphi 0, %s44
    %s47 = sphi 0, %s46
    %s61 = sphi 0, %s47
    %s65 = sphi 0, %s65
    %s67 = sphi 0, %s65
    %s68 = sphi 0, %s67
    %s82 = sphi 0, %s68
    %s86 = sphi 0, %s86
    %s88 = sphi 0, %s86
    %s89 = sphi 0, %s88
    %s103 = sphi 0, %s89
    %s109 = sphi 0, %s111
    %s112 = sphi 0, %s109
    %s113 = sphi 0, %s112
    %s129 = sphi 0, %s113
  $region4: #{mha_block.1} parent=0 // loop_header_branch
    %13 = sbr.rel (%p11) target = $region8
  $region5: #{mha_block.1} parent=0 // loop_body
    %s15 = ssub.s32 %s10, 1
    %s16 = ssub.s32 %s10, 2
    %s17 = sadd.s32 %s10, 1
    %s18 = ssub.s32 %s10, %s17
    %p19 = scmp.eq.s32.totalorder %s18, 0
    %s21 = sadd.s32 %s20, 1
    %s22 = scalar_select %p19, %s20, %s21
    %p25 = pneg %p19
    %p26 = scmp.eq.s32.totalorder %s10, 1
    %p27 = por %p25, %p26
    %p28 = scmp.ne.s32.totalorder %s20, %s23
    %p29 = scmp.eq.s32.totalorder %s10, 0
    %p30 = por %p28, %p29
    %p31 = scmp.ne.s32.totalorder %s20, %s23
    %p32 = scmp.eq.s32.totalorder %s15, 1
    %p33 = por %p31, %p32
    %p34 = scmp.ne.s32.totalorder %s23, %s24
    %p35 = scmp.eq.s32.totalorder %s15, 0
    %p36 = por %p34, %p35
    %p37 = scmp.ne.s32.totalorder %s23, %s24
    %p38 = scmp.eq.s32.totalorder %s16, 1
    %p39 = por %p37, %p38
    %p41 = scmp.ne.s32.totalorder %s24, %s40
    %p42 = scmp.eq.s32.totalorder %s16, 0
    %p43 = por %p41, %p42
    %s45 = sadd.s32 %s44, 1
    %p48 = scmp.eq.s32.totalorder %s10, 1
    %p49 = scmp.ne.s32.totalorder %s44, %s46
    %p50 = scmp.eq.s32.totalorder %s10, 0
    %p51 = por %p49, %p50
    %p52 = scmp.ne.s32.totalorder %s44, %s46
    %p53 = scmp.eq.s32.totalorder %s15, 1
    %p54 = por %p52, %p53
    %p55 = scmp.ne.s32.totalorder %s46, %s47
    %p56 = scmp.eq.s32.totalorder %s15, 0
    %p57 = por %p55, %p56
    %p58 = scmp.ne.s32.totalorder %s46, %s47
    %p59 = scmp.eq.s32.totalorder %s16, 1
    %p60 = por %p58, %p59
    %p62 = scmp.ne.s32.totalorder %s47, %s61
    %p63 = scmp.eq.s32.totalorder %s16, 0
    %p64 = por %p62, %p63
    %s66 = sadd.s32 %s65, 1
    %p69 = scmp.eq.s32.totalorder %s10, 1
    %p70 = scmp.ne.s32.totalorder %s65, %s67
    %p71 = scmp.eq.s32.totalorder %s10, 0
    %p72 = por %p70, %p71
    %p73 = scmp.ne.s32.totalorder %s65, %s67
    %p74 = scmp.eq.s32.totalorder %s15, 1
    %p75 = por %p73, %p74
    %p76 = scmp.ne.s32.totalorder %s67, %s68
    %p77 = scmp.eq.s32.totalorder %s15, 0
    %p78 = por %p76, %p77
    %p79 = scmp.ne.s32.totalorder %s67, %s68
    %p80 = scmp.eq.s32.totalorder %s16, 1
    %p81 = por %p79, %p80
    %p83 = scmp.ne.s32.totalorder %s68, %s82
    %p84 = scmp.eq.s32.totalorder %s16, 0
    %p85 = por %p83, %p84
    %s87 = sadd.s32 %s86, 1
    %p90 = scmp.eq.s32.totalorder %s10, 1
    %p91 = scmp.ne.s32.totalorder %s86, %s88
    %p92 = scmp.eq.s32.totalorder %s10, 0
    %p93 = por %p91, %p92
    %p94 = scmp.ne.s32.totalorder %s86, %s88
    %p95 = scmp.eq.s32.totalorder %s15, 1
    %p96 = por %p94, %p95
    %p97 = scmp.ne.s32.totalorder %s88, %s89
    %p98 = scmp.eq.s32.totalorder %s15, 0
    %p99 = por %p97, %p98
    %p100 = scmp.ne.s32.totalorder %s88, %s89
    %p101 = scmp.eq.s32.totalorder %s16, 1
    %p102 = por %p100, %p101
    %p104 = scmp.ne.s32.totalorder %s89, %s103
    %p105 = scmp.eq.s32.totalorder %s16, 0
    %p106 = por %p104, %p105
    %s107 = ssub.s32 %s10, %s17
    %p108 = scmp.eq.s32.totalorder %s107, 0
    %s110 = sadd.s32 %s109, 1
    %s111 = scalar_select %p108, %s109, %s110
    %p114 = pneg %p108
    %p115 = scmp.eq.s32.totalorder %s10, 1
    %p116 = por %p114, %p115
    %p117 = scmp.ne.s32.totalorder %s109, %s112
    %p118 = scmp.eq.s32.totalorder %s10, 0
    %p119 = por %p117, %p118
    %p120 = scmp.ne.s32.totalorder %s109, %s112
    %p121 = scmp.eq.s32.totalorder %s15, 1
    %p122 = por %p120, %p121
    %p123 = scmp.ne.s32.totalorder %s112, %s113
    %p124 = scmp.eq.s32.totalorder %s15, 0
    %p125 = por %p123, %p124
    %p126 = scmp.ne.s32.totalorder %s112, %s113
    %p127 = scmp.eq.s32.totalorder %s16, 1
    %p128 = por %p126, %p127
    %p130 = scmp.ne.s32.totalorder %s113, %s129
    %p131 = scmp.eq.s32.totalorder %s16, 0
    %p132 = por %p130, %p131
    %p133 = scmp.le.s32.totalorder 1, %s10
    %p134 = scmp.lt.s32.totalorder %s10, 3
    %p135 = pnand %p133, %p134
    %p136 = pneg %p135
    // Predicated region
    $region9: #{mha_block.1} parent=5 // pred_check
      _
    $region10: #{mha_block.1} parent=5 // pred_check_branch
      %138 = sbr.rel (%p135) target = $region12
    $region11: #{mha_block.1} parent=5 // pred_region
      %s139 = ssub.s32 %s10, 1
      // Predicated region
      $region13: #{mha_block.1} parent=11 // pred_check
        %p140 = pneg %p57
      $region14: #{mha_block.1} parent=11 // pred_check_branch
        %142 = sbr.rel (%p140) target = $region16
      $region15: #{mha_block.1} parent=11 // pred_region
        _
      $region16: #{mha_block.1} parent=11 // pred_fallthru
        _
      // Predicated region
      $region17: #{mha_block.1} parent=11 // pred_check
        %p143 = pneg %p78
      $region18: #{mha_block.1} parent=11 // pred_check_branch
        %145 = sbr.rel (%p143) target = $region20
      $region19: #{mha_block.1} parent=11 // pred_region
        _
      $region20: #{mha_block.1} parent=11 // pred_fallthru
        _
      // Predicated region
      $region21: #{mha_block.1} parent=11 // pred_check
        %p146 = pneg %p99
      $region22: #{mha_block.1} parent=11 // pred_check_branch
        %148 = sbr.rel (%p146) target = $region24
      $region23: #{mha_block.1} parent=11 // pred_region
        _
      $region24: #{mha_block.1} parent=11 // pred_fallthru
        _
    $region12: #{mha_block.1} parent=5 // pred_fallthru
      _
    %p149 = scmp.lt.s32.totalorder %s10, 2
    // Predicated region
    $region25: #{mha_block.1} parent=5 // pred_check
      %p150 = pneg %p149
    $region26: #{mha_block.1} parent=5 // pred_check_branch
      %152 = sbr.rel (%p150) target = $region28
    $region27: #{mha_block.1} parent=5 // pred_region
      // Predicated region
      $region29: #{mha_block.1} parent=27 // pred_check
        %p153 = pneg %p30
      $region30: #{mha_block.1} parent=27 // pred_check_branch
        %155 = sbr.rel (%p153) target = $region32
      $region31: #{mha_block.1} parent=27 // pred_region
        %p156 = scmp.lt.s32.totalorder %s10, 1
        %s157 = scalar_select %p156, %s10, 1
        %s158 = smul.addr %s157, 8
        %s159 = scalar_lea.vmem %s0, %s158
      $region32: #{mha_block.1} parent=27 // pred_fallthru
        _
    $region28: #{mha_block.1} parent=5 // pred_fallthru
      _
    %p160 = scmp.le.s32.totalorder 1, %s10
    %p161 = scmp.lt.s32.totalorder %s10, 3
    %p162 = pnand %p160, %p161
    %p163 = pneg %p162
    // Predicated region
    $region33: #{mha_block.1} parent=5 // pred_check
      _
    $region34: #{mha_block.1} parent=5 // pred_check_branch
      %165 = sbr.rel (%p162) target = $region36
    $region35: #{mha_block.1} parent=5 // pred_region
      %s166 = ssub.s32 %s10, 1
      %p167 = scmp.lt.s32.totalorder %s15, 1
      %s168 = scalar_select %p167, %s15, 1
      %s169 = smul.addr %s168, 8
      %s170 = scalar_lea.vmem %s0, %s169
      %p171 = pneg %p36
      %p172 = pneg %p33
      %p173 = pneg %p57
      %p174 = pneg %p54
      %p175 = pneg %p78
      %p176 = pneg %p75
      %p177 = pneg %p99
      %p178 = pneg %p96
      %p179 = pneg %p125
      %p180 = pneg %p122
      %p181 = scmp.lt.s32.totalorder %s15, 1
      %s182 = scalar_select %p181, %s15, 1
      %s183 = smul.addr %s182, 8
      %s184 = scalar_lea.vmem %s4, %s183
      %p185 = scmp.lt.s32.totalorder %s15, 1
      %s186 = scalar_select %p185, %s15, 1
      %s187 = smul.addr %s186, 8
      %s188 = scalar_lea.vmem %s0, %s187
      %p189 = scmp.lt.s32.totalorder %s15, 1
      %s190 = scalar_select %p189, %s15, 1
      %s191 = smul.addr %s190, 8
      %s192 = scalar_lea.vmem %s4, %s191
      %v193 = vld [vmem:[%s188] sm:$0xff]
      %v194 = vcombine.high %v193, 0.0
      %v196 = vunpack.c.l.s4 1983009808
      %v197 = vunpack.c.0.s8 %v196
      %v198 = vlaneseq
      %v199 = vshrl.u32 %v198, 7
      %v200 = vsub.s32 %v197, %v199
      %v201 = vrot.slane %v193, %v200
      %v203 = vunpack.c.l.s4 1983009808
      %v204 = vunpack.c.0.s8 %v203
      %v205 = vlaneseq
      %v206 = vshrl.u32 %v205, 7
      %v207 = vsub.s32 %v204, %v206
      %v208 = vrot.slane %v194, %v207
      %v209 = vcombine.high %v201, 0.0
      %v211 = vunpack.c.l.s4 1934713408
      %v212 = vunpack.c.0.s8 %v211
      %v213 = vlaneseq
      %v214 = vshrl.u32 %v213, 7
      %v215 = vsub.s32 %v212, %v214
      %v216 = vrot.slane %v201, %v215
      %v218 = vunpack.c.l.s4 1934713408
      %v219 = vunpack.c.0.s8 %v218
      %v220 = vlaneseq
      %v221 = vshrl.u32 %v220, 7
      %v222 = vsub.s32 %v219, %v221
      %v223 = vrot.slane %v209, %v222
      %v224 = vcombine.high %v208, 0.0
      %v226 = vunpack.c.l.s4 1934713408
      %v227 = vunpack.c.0.s8 %v226
      %v228 = vlaneseq
      %v229 = vshrl.u32 %v228, 7
      %v230 = vsub.s32 %v227, %v229
      %v231 = vrot.slane %v208, %v230
      %v233 = vunpack.c.l.s4 1934713408
      %v234 = vunpack.c.0.s8 %v233
      %v235 = vlaneseq
      %v236 = vshrl.u32 %v235, 7
      %v237 = vsub.s32 %v234, %v236
      %v238 = vrot.slane %v224, %v237
      %v239 = vcombine.high %v216, 0.0
      %v240 = vcombine.high %v223, 0.0
      %v241 = vcombine.high %v231, 0.0
      %v242 = vcombine.high %v238, 0.0
      %v243 = vld [vmem:[%s1] sm:$0x3f]
      %v252 = vrot.slane %v239, 7
      %vm253 = vcmask 1041409
      %v254 = vsel %vm253, %v252, %v216
      %v255 = vrot.slane %v223, 6
      %vm256 = vcmask 1042434
      %v257 = vsel %vm256, %v255, %v254
      %v258 = vrot.slane %v240, 5
      %vm259 = vcmask 1043459
      %v260 = vsel %vm259, %v258, %v257
      %v261 = vrot.slane %v231, 4
      %vm262 = vcmask 1044484
      %v263 = vsel %vm262, %v261, %v260
      %v264 = vrot.slane %v241, 3
      %vm265 = vcmask 1045509
      %v266 = vsel %vm265, %v264, %v263
      %v267 = vrot.slane %v238, 2
      %vm268 = vcmask 1046534
      %v269 = vsel %vm268, %v267, %v266
      %v270 = vrot.slane %v242, 1
      %vm271 = vcmask 1047559
      %v272 = vsel %vm271, %v270, %v269
      %vm274 = vcmask 261120
      %v275 = vsel %vm274, %v272, 0.0
      %276 = vadd.xlane.f32.xlu0 %v275
      %v277 = vpop.xlane.xlu0 %276
      %v278 = vrcp.pop 32.0
      %v279 = vmul.f32 %v277, %v278
      %v281 = vrot.slane %v279, 1
      %v282 = vrot.slane %v279, 2
      %v283 = vrot.slane %v279, 3
      %v284 = vrot.slane %v279, 4
      %v285 = vrot.slane %v279, 5
      %v286 = vrot.slane %v279, 6
      %v287 = vrot.slane %v279, 7
      %v296 = vsub.f32 %v216, %v279
      %v297 = vsub.f32 %v239, %v281
      %v298 = vsub.f32 %v223, %v282
      %v299 = vsub.f32 %v240, %v283
      %v300 = vsub.f32 %v231, %v284
      %v301 = vsub.f32 %v241, %v285
      %v302 = vsub.f32 %v238, %v286
      %v303 = vsub.f32 %v242, %v287
      %v304 = vmul.f32 %v296, %v296
      %v305 = vmul.f32 %v297, %v297
      %v306 = vmul.f32 %v298, %v298
      %v307 = vmul.f32 %v299, %v299
      %v308 = vmul.f32 %v300, %v300
      %v309 = vmul.f32 %v301, %v301
      %v310 = vmul.f32 %v302, %v302
      %v311 = vmul.f32 %v303, %v303
      %v320 = vrot.slane %v305, 7
      %v321 = vsel %vm253, %v320, %v304
      %v322 = vrot.slane %v306, 6
      %v323 = vsel %vm256, %v322, %v321
      %v324 = vrot.slane %v307, 5
      %v325 = vsel %vm259, %v324, %v323
      %v326 = vrot.slane %v308, 4
      %v327 = vsel %vm262, %v326, %v325
      %v328 = vrot.slane %v309, 3
      %v329 = vsel %vm265, %v328, %v327
      %v330 = vrot.slane %v310, 2
      %v331 = vsel %vm268, %v330, %v329
      %v332 = vrot.slane %v311, 1
      %v333 = vsel %vm271, %v332, %v331
      %v335 = vsel %vm274, %v333, 0.0
      %336 = vadd.xlane.f32.xlu0 %v335
      %v337 = vpop.xlane.xlu0 %336
      %v338 = vmul.f32 %v337, %v278
      %v339 = vadd.f32 %v338, 1e-05
      %v340 = vrsqrt.pop %v339
      %v342 = vrot.slane %v340, 1
      %v343 = vrot.slane %v340, 2
      %v344 = vrot.slane %v340, 3
      %v345 = vrot.slane %v340, 4
      %v346 = vrot.slane %v340, 5
      %v347 = vrot.slane %v340, 6
      %v348 = vrot.slane %v340, 7
      %v357 = vmul.f32 %v296, %v340
      %v358 = vmul.f32 %v297, %v342
      %v359 = vmul.f32 %v298, %v343
      %v360 = vmul.f32 %v299, %v344
      %v361 = vmul.f32 %v300, %v345
      %v362 = vmul.f32 %v301, %v346
      %v363 = vmul.f32 %v302, %v347
      %v364 = vmul.f32 %v303, %v348
      %v365 = vlaneseq
      %v366 = vshrl.u32 %v365, 7
      %v367 = vsub.s32 0, %v366
      %v368 = vrot.slane %v243, %v367
      %v369 = vmul.f32 %v357, %v368
      %v370 = vmul.f32 %v358, %v368
      %v371 = vmul.f32 %v359, %v368
      %v372 = vmul.f32 %v360, %v368
      %v373 = vmul.f32 %v361, %v368
      %v374 = vmul.f32 %v362, %v368
      %v375 = vmul.f32 %v363, %v368
      %v376 = vmul.f32 %v364, %v368
      %v377 = vlaneseq
      %v378 = vshrl.u32 %v377, 7
      %v379 = vsub.s32 1, %v378
      %v380 = vrot.slane %v243, %v379
      %v381 = vadd.f32 %v369, %v380
      %v382 = vadd.f32 %v370, %v380
      %v383 = vadd.f32 %v371, %v380
      %v384 = vadd.f32 %v372, %v380
      %v385 = vadd.f32 %v373, %v380
      %v386 = vadd.f32 %v374, %v380
      %v387 = vadd.f32 %v375, %v380
      %v388 = vadd.f32 %v376, %v380
      %v389 = vld [vmem:[%s2] sm:$0xff]
      %v390 = vld [vmem:[%s2 + $0x8] sm:$0xff]
      %v391 = vld [vmem:[%s2 + $0x10] sm:$0xff]
      %v392 = vld [vmem:[%s2 + $0x18] sm:$0xff]
      %v401 = vrot.slane %v382, 7
      %v402 = vsel %vm253, %v401, %v381
      %v403 = vrot.slane %v383, 6
      %v404 = vsel %vm256, %v403, %v402
      %v405 = vrot.slane %v384, 5
      %v406 = vsel %vm259, %v405, %v404
      %v407 = vrot.slane %v385, 4
      %v408 = vsel %vm262, %v407, %v406
      %v409 = vrot.slane %v386, 3
      %v410 = vsel %vm265, %v409, %v408
      %v411 = vrot.slane %v387, 2
      %v412 = vsel %vm268, %v411, %v410
      %v413 = vrot.slane %v388, 1
      %v414 = vsel %vm271, %v413, %v412
      %v415 = vsel %vm274, %v414, 0
      %417 = vmatprep.subr.mxu0 0.0
      %418 = vmatpush1.msra.mxu0 %v389
      %419 = vmatprep.subr.mxu0 0.0
      %420 = vmatpush1.msra.mxu0 %v390
      %421 = vmatprep.subr.mxu0 0.0
      %422 = vmatpush1.msra.mxu0 %v391
      %423 = vmatprep.subr.mxu0 0.0
      %424 = vmatpush1.msra.mxu0 %v392
      %425 = vmatprep.subr.mxu0 0.0
      %426 = vmatpush1.msra.mxu0 0.0
      %427 = vmatprep.subr.mxu0 0.0
      %428 = vmatpush1.msra.mxu0 0.0
      %429 = vmatprep.subr.mxu0 0.0
      %430 = vmatpush1.msra.mxu0 0.0
      %431 = vmatprep.subr.mxu0 0.0
      %432 = vmatpush1.msra.mxu0 0.0
      %433 = vmatprep.subr.mxu0 0.0
      %434 = vmatpush1.msra.mxu0 0.0
      %435 = vmatprep.subr.mxu0 0.0
      %436 = vmatpush1.msra.mxu0 0.0
      %437 = vmatprep.subr.mxu0 0.0
      %438 = vmatpush1.msra.mxu0 0.0
      %439 = vmatprep.subr.mxu0 0.0
      %440 = vmatpush1.msra.mxu0 0.0
      %441 = vmatprep.subr.mxu0 0.0
      %442 = vmatpush1.msra.mxu0 0.0
      %443 = vmatprep.subr.mxu0 0.0
      %444 = vmatpush1.msra.mxu0 0.0
      %445 = vmatprep.subr.mxu0 0.0
      %446 = vmatpush1.msra.mxu0 0.0
      %447 = vmatprep.subr.mxu0 0.0
      %448 = vmatpush1.msra.mxu0 0.0
      %449 = vmatprep.subr.mxu0 0.0
      %450 = vmatpush1.msra.mxu0 0.0
      %451 = vmatprep.subr.mxu0 0.0
      %452 = vmatpush1.msra.mxu0 0.0
      %453 = vmatprep.subr.mxu0 0.0
      %454 = vmatpush1.msra.mxu0 0.0
      %455 = vmatprep.subr.mxu0 0.0
      %456 = vmatpush1.msra.mxu0 0.0
      %457 = vmatprep.subr.mxu0 0.0
      %458 = vmatpush1.msra.mxu0 0.0
      %459 = vmatprep.subr.mxu0 0.0
      %460 = vmatpush1.msra.mxu0 0.0
      %461 = vmatprep.subr.mxu0 0.0
      %462 = vmatpush1.msra.mxu0 0.0
      %463 = vmatprep.subr.mxu0 0.0
      %464 = vmatpush1.msra.mxu0 0.0
      %465 = vmatprep.subr.mxu0 0.0
      %466 = vmatpush1.msra.mxu0 0.0
      %467 = vmatprep.subr.mxu0 0.0
      %468 = vmatpush1.msra.mxu0 0.0
      %469 = vmatprep.subr.mxu0 0.0
      %470 = vmatpush1.msra.mxu0 0.0
      %471 = vmatprep.subr.mxu0 0.0
      %472 = vmatpush1.msra.mxu0 0.0
      %473 = vmatprep.subr.mxu0 0.0
      %474 = vmatpush1.msra.mxu0 0.0
      %475 = vmatprep.subr.mxu0 0.0
      %476 = vmatpush1.msra.mxu0 0.0
      %477 = vmatprep.subr.mxu0 0.0
      %478 = vmatpush1.msra.mxu0 0.0
      %479 = vmatprep.subr.mxu0 0.0
      %480 = vmatpush1.msra.mxu0 0.0
      %481 = vmatprep.mubr.f32.mxu0 0.0
      %482 = vmatmul.mubr.f32.gmra.mrb[0].mxu0 %v415
      %v483 = vpop.f32.mrb[0].mxu0
      %v484 = vadd.f32 0.0, %v483
      %v485 = vpop.f32.mrb[0].mxu0
      %486 = vdwg.mxu0
      %v487 = vlaneseq
      %v488 = vshrl.u32 %v487, 7
      %v489 = vsub.s32 2, %v488
      %v490 = vrot.slane %v243, %v489
      %v491 = vadd.f32 %v484, %v490
      %v492 = vmul.f32 %v491, 0.35355338
      %v493 = vlaneseq
      %v494 = vshrl.u32 %v493, 7
      %v495 = vsub.s32 3, %v494
      %v496 = vrot.slane %v243, %v495
      %498 = vrot.lane.b32.xlu0 %v496, 32
      %v499 = vpop.permute.xlu0 %498
      %v501 = vadd.f32 %v484, %v499
      %v502 = vlaneseq
      %v503 = vshrl.u32 %v502, 7
      %v504 = vsub.s32 4, %v503
      %v505 = vrot.slane %v243, %v504
      %507 = vrot.lane.b32.xlu0 %v505, 64
      %v508 = vpop.permute.xlu0 %507
      %v510 = vadd.f32 %v484, %v508
      %512 = vrot.lane.b32.xlu0 %v492, 120
      %v513 = vpop.permute.xlu0 %512
      %515 = vrot.lane.b32.xlu0 %v492, 112
      %v516 = vpop.permute.xlu0 %515
      %518 = vrot.lane.b32.xlu0 %v492, 104
      %v519 = vpop.permute.xlu0 %518
      %v521 = vcombine.low %v492, %v516
      %v522 = vcombine.high %v492, %v516
      %v524 = vunpack.c.l.s4 1983009808
      %v525 = vunpack.c.0.s8 %v524
      %v526 = vlaneseq
      %v527 = vshrl.u32 %v526, 7
      %v528 = vsub.s32 %v525, %v527
      %v529 = vrot.slane %v521, %v528
      %v531 = vunpack.c.l.s4 1983009808
      %v532 = vunpack.c.0.s8 %v531
      %v533 = vlaneseq
      %v534 = vshrl.u32 %v533, 7
      %v535 = vsub.s32 %v532, %v534
      %v536 = vrot.slane %v522, %v535
      %v537 = vcombine.low %v513, %v519
      %v538 = vcombine.high %v513, %v519
      %v540 = vunpack.c.l.s4 1983009808
      %v541 = vunpack.c.0.s8 %v540
      %v542 = vlaneseq
      %v543 = vshrl.u32 %v542, 7
      %v544 = vsub.s32 %v541, %v543
      %v545 = vrot.slane %v537, %v544
      %v547 = vunpack.c.l.s4 1983009808
      %v548 = vunpack.c.0.s8 %v547
      %v549 = vlaneseq
      %v550 = vshrl.u32 %v549, 7
      %v551 = vsub.s32 %v548, %v550
      %v552 = vrot.slane %v538, %v551
      %v553 = vcombine.low %v529, %v545
      %v554 = vcombine.high %v529, %v545
      %v556 = vunpack.c.l.s4 1934713408
      %v557 = vunpack.c.0.s8 %v556
      %v558 = vlaneseq
      %v559 = vshrl.u32 %v558, 7
      %v560 = vsub.s32 %v557, %v559
      %v561 = vrot.slane %v553, %v560
      %v563 = vunpack.c.l.s4 1934713408
      %v564 = vunpack.c.0.s8 %v563
      %v565 = vlaneseq
      %v566 = vshrl.u32 %v565, 7
      %v567 = vsub.s32 %v564, %v566
      %v568 = vrot.slane %v554, %v567
      %v569 = vcombine.low %v536, %v552
      %v570 = vcombine.high %v536, %v552
      %v572 = vunpack.c.l.s4 1934713408
      %v573 = vunpack.c.0.s8 %v572
      %v574 = vlaneseq
      %v575 = vshrl.u32 %v574, 7
      %v576 = vsub.s32 %v573, %v575
      %v577 = vrot.slane %v569, %v576
      %v579 = vunpack.c.l.s4 1934713408
      %v580 = vunpack.c.0.s8 %v579
      %v581 = vlaneseq
      %v582 = vshrl.u32 %v581, 7
      %v583 = vsub.s32 %v580, %v582
      %v584 = vrot.slane %v570, %v583
      %v585 = vcombine.high %v561, 0.0
      %v586 = vcombine.high %v568, 0.0
      %v587 = vcombine.high %v577, 0.0
      %v588 = vcombine.high %v584, 0.0
      %v589 = vcombine.low %v561, %v568
      %v591 = vunpack.c.l.s4 1983009808
      %v592 = vunpack.c.0.s8 %v591
      %v593 = vlaneseq
      %v594 = vshrl.u32 %v593, 7
      %v595 = vsub.s32 %v592, %v594
      %v596 = vrot.slane %v589, %v595
      %v597 = vcombine.low %v585, %v586
      %v599 = vunpack.c.l.s4 1983009808
      %v600 = vunpack.c.0.s8 %v599
      %v601 = vlaneseq
      %v602 = vshrl.u32 %v601, 7
      %v603 = vsub.s32 %v600, %v602
      %v604 = vrot.slane %v597, %v603
      %v605 = vcombine.low %v577, %v584
      %v607 = vunpack.c.l.s4 1983009808
      %v608 = vunpack.c.0.s8 %v607
      %v609 = vlaneseq
      %v610 = vshrl.u32 %v609, 7
      %v611 = vsub.s32 %v608, %v610
      %v612 = vrot.slane %v605, %v611
      %v613 = vcombine.low %v587, %v588
      %v615 = vunpack.c.l.s4 1983009808
      %v616 = vunpack.c.0.s8 %v615
      %v617 = vlaneseq
      %v618 = vshrl.u32 %v617, 7
      %v619 = vsub.s32 %v616, %v618
      %v620 = vrot.slane %v613, %v619
      %v621 = vcombine.low %v596, %v604
      %v622 = vcombine.high %v596, %v604
      %v624 = vunpack.c.l.s4 1934713408
      %v625 = vunpack.c.0.s8 %v624
      %v626 = vlaneseq
      %v627 = vshrl.u32 %v626, 7
      %v628 = vsub.s32 %v625, %v627
      %v629 = vrot.slane %v621, %v628
      %v631 = vunpack.c.l.s4 1934713408
      %v632 = vunpack.c.0.s8 %v631
      %v633 = vlaneseq
      %v634 = vshrl.u32 %v633, 7
      %v635 = vsub.s32 %v632, %v634
      %v636 = vrot.slane %v622, %v635
      %v637 = vcombine.low %v612, %v620
      %v638 = vcombine.high %v612, %v620
      %v640 = vunpack.c.l.s4 1934713408
      %v641 = vunpack.c.0.s8 %v640
      %v642 = vlaneseq
      %v643 = vshrl.u32 %v642, 7
      %v644 = vsub.s32 %v641, %v643
      %v645 = vrot.slane %v637, %v644
      %v647 = vunpack.c.l.s4 1934713408
      %v648 = vunpack.c.0.s8 %v647
      %v649 = vlaneseq
      %v650 = vshrl.u32 %v649, 7
      %v651 = vsub.s32 %v648, %v650
      %v652 = vrot.slane %v638, %v651
      %v653 = vcombine.low %v629, %v645
      %v654 = vcombine.high %v629, %v645
      %v655 = vcombine.low %v636, %v652
      %v656 = vcombine.high %v636, %v652
      %658 = vrot.lane.b32.xlu0 %v501, 120
      %v659 = vpop.permute.xlu0 %658
      %660 = vrot.lane.b32.xlu0 %v501, 112
      %v661 = vpop.permute.xlu0 %660
      %662 = vrot.lane.b32.xlu0 %v501, 104
      %v663 = vpop.permute.xlu0 %662
      %664 = vrot.lane.b32.xlu0 %v501, 96
      %v665 = vpop.permute.xlu0 %664
      %666 = vrot.lane.b32.xlu0 %v659, 96
      %v667 = vpop.permute.xlu0 %666
      %668 = vrot.lane.b32.xlu0 %v661, 96
      %v669 = vpop.permute.xlu0 %668
      %670 = vrot.lane.b32.xlu0 %v663, 96
      %v671 = vpop.permute.xlu0 %670
      %v676 = vcombine.low %v665, %v669
      %v677 = vcombine.high %v665, %v669
      %v679 = vunpack.c.l.s4 1983009808
      %v680 = vunpack.c.0.s8 %v679
      %v681 = vlaneseq
      %v682 = vshrl.u32 %v681, 7
      %v683 = vsub.s32 %v680, %v682
      %v684 = vrot.slane %v676, %v683
      %v686 = vunpack.c.l.s4 1983009808
      %v687 = vunpack.c.0.s8 %v686
      %v688 = vlaneseq
      %v689 = vshrl.u32 %v688, 7
      %v690 = vsub.s32 %v687, %v689
      %v691 = vrot.slane %v677, %v690
      %v692 = vcombine.low %v667, %v671
      %v693 = vcombine.high %v667, %v671
      %v695 = vunpack.c.l.s4 1983009808
      %v696 = vunpack.c.0.s8 %v695
      %v697 = vlaneseq
      %v698 = vshrl.u32 %v697, 7
      %v699 = vsub.s32 %v696, %v698
      %v700 = vrot.slane %v692, %v699
      %v702 = vunpack.c.l.s4 1983009808
      %v703 = vunpack.c.0.s8 %v702
      %v704 = vlaneseq
      %v705 = vshrl.u32 %v704, 7
      %v706 = vsub.s32 %v703, %v705
      %v707 = vrot.slane %v693, %v706
      %v708 = vcombine.low %v684, %v700
      %v709 = vcombine.high %v684, %v700
      %v711 = vunpack.c.l.s4 1934713408
      %v712 = vunpack.c.0.s8 %v711
      %v713 = vlaneseq
      %v714 = vshrl.u32 %v713, 7
      %v715 = vsub.s32 %v712, %v714
      %v716 = vrot.slane %v708, %v715
      %v718 = vunpack.c.l.s4 1934713408
      %v719 = vunpack.c.0.s8 %v718
      %v720 = vlaneseq
      %v721 = vshrl.u32 %v720, 7
      %v722 = vsub.s32 %v719, %v721
      %v723 = vrot.slane %v709, %v722
      %v724 = vcombine.low %v691, %v707
      %v725 = vcombine.high %v691, %v707
      %v727 = vunpack.c.l.s4 1934713408
      %v728 = vunpack.c.0.s8 %v727
      %v729 = vlaneseq
      %v730 = vshrl.u32 %v729, 7
      %v731 = vsub.s32 %v728, %v730
      %v732 = vrot.slane %v724, %v731
      %v734 = vunpack.c.l.s4 1934713408
      %v735 = vunpack.c.0.s8 %v734
      %v736 = vlaneseq
      %v737 = vshrl.u32 %v736, 7
      %v738 = vsub.s32 %v735, %v737
      %v739 = vrot.slane %v725, %v738
      %v740 = vcombine.high %v716, 0.0
      %v741 = vcombine.high %v723, 0.0
      %v742 = vcombine.high %v732, 0.0
      %v743 = vcombine.high %v739, 0.0
      %v744 = vcombine.low %v716, %v723
      %v746 = vunpack.c.l.s4 1983009808
      %v747 = vunpack.c.0.s8 %v746
      %v748 = vlaneseq
      %v749 = vshrl.u32 %v748, 7
      %v750 = vsub.s32 %v747, %v749
      %v751 = vrot.slane %v744, %v750
      %v752 = vcombine.low %v740, %v741
      %v754 = vunpack.c.l.s4 1983009808
      %v755 = vunpack.c.0.s8 %v754
      %v756 = vlaneseq
      %v757 = vshrl.u32 %v756, 7
      %v758 = vsub.s32 %v755, %v757
      %v759 = vrot.slane %v752, %v758
      %v760 = vcombine.low %v732, %v739
      %v762 = vunpack.c.l.s4 1983009808
      %v763 = vunpack.c.0.s8 %v762
      %v764 = vlaneseq
      %v765 = vshrl.u32 %v764, 7
      %v766 = vsub.s32 %v763, %v765
      %v767 = vrot.slane %v760, %v766
      %v768 = vcombine.low %v742, %v743
      %v770 = vunpack.c.l.s4 1983009808
      %v771 = vunpack.c.0.s8 %v770
      %v772 = vlaneseq
      %v773 = vshrl.u32 %v772, 7
      %v774 = vsub.s32 %v771, %v773
      %v775 = vrot.slane %v768, %v774
      %v776 = vcombine.low %v751, %v759
      %v777 = vcombine.high %v751, %v759
      %v779 = vunpack.c.l.s4 1934713408
      %v780 = vunpack.c.0.s8 %v779
      %v781 = vlaneseq
      %v782 = vshrl.u32 %v781, 7
      %v783 = vsub.s32 %v780, %v782
      %v784 = vrot.slane %v776, %v783
      %v786 = vunpack.c.l.s4 1934713408
      %v787 = vunpack.c.0.s8 %v786
      %v788 = vlaneseq
      %v789 = vshrl.u32 %v788, 7
      %v790 = vsub.s32 %v787, %v789
      %v791 = vrot.slane %v777, %v790
      %v792 = vcombine.low %v767, %v775
      %v793 = vcombine.high %v767, %v775
      %v795 = vunpack.c.l.s4 1934713408
      %v796 = vunpack.c.0.s8 %v795
      %v797 = vlaneseq
      %v798 = vshrl.u32 %v797, 7
      %v799 = vsub.s32 %v796, %v798
      %v800 = vrot.slane %v792, %v799
      %v802 = vunpack.c.l.s4 1934713408
      %v803 = vunpack.c.0.s8 %v802
      %v804 = vlaneseq
      %v805 = vshrl.u32 %v804, 7
      %v806 = vsub.s32 %v803, %v805
      %v807 = vrot.slane %v793, %v806
      %v808 = vcombine.low %v784, %v800
      %v809 = vcombine.high %v784, %v800
      %v810 = vcombine.low %v791, %v807
      %v811 = vcombine.high %v791, %v807
      %813 = vrot.lane.b32.xlu0 %v510, 120
      %v814 = vpop.permute.xlu0 %813
      %815 = vrot.lane.b32.xlu0 %v510, 112
      %v816 = vpop.permute.xlu0 %815
      %817 = vrot.lane.b32.xlu0 %v510, 104
      %v818 = vpop.permute.xlu0 %817
      %819 = vrot.lane.b32.xlu0 %v510, 64
      %v820 = vpop.permute.xlu0 %819
      %821 = vrot.lane.b32.xlu0 %v814, 64
      %v822 = vpop.permute.xlu0 %821
      %823 = vrot.lane.b32.xlu0 %v816, 64
      %v824 = vpop.permute.xlu0 %823
      %825 = vrot.lane.b32.xlu0 %v818, 64
      %v826 = vpop.permute.xlu0 %825
      %v831 = vcombine.low %v820, %v824
      %v832 = vcombine.high %v820, %v824
      %v834 = vunpack.c.l.s4 1983009808
      %v835 = vunpack.c.0.s8 %v834
      %v836 = vlaneseq
      %v837 = vshrl.u32 %v836, 7
      %v838 = vsub.s32 %v835, %v837
      %v839 = vrot.slane %v831, %v838
      %v841 = vunpack.c.l.s4 1983009808
      %v842 = vunpack.c.0.s8 %v841
      %v843 = vlaneseq
      %v844 = vshrl.u32 %v843, 7
      %v845 = vsub.s32 %v842, %v844
      %v846 = vrot.slane %v832, %v845
      %v847 = vcombine.low %v822, %v826
      %v848 = vcombine.high %v822, %v826
      %v850 = vunpack.c.l.s4 1983009808
      %v851 = vunpack.c.0.s8 %v850
      %v852 = vlaneseq
      %v853 = vshrl.u32 %v852, 7
      %v854 = vsub.s32 %v851, %v853
      %v855 = vrot.slane %v847, %v854
      %v857 = vunpack.c.l.s4 1983009808
      %v858 = vunpack.c.0.s8 %v857
      %v859 = vlaneseq
      %v860 = vshrl.u32 %v859, 7
      %v861 = vsub.s32 %v858, %v860
      %v862 = vrot.slane %v848, %v861
      %v863 = vcombine.low %v839, %v855
      %v864 = vcombine.high %v839, %v855
      %v866 = vunpack.c.l.s4 1934713408
      %v867 = vunpack.c.0.s8 %v866
      %v868 = vlaneseq
      %v869 = vshrl.u32 %v868, 7
      %v870 = vsub.s32 %v867, %v869
      %v871 = vrot.slane %v863, %v870
      %v873 = vunpack.c.l.s4 1934713408
      %v874 = vunpack.c.0.s8 %v873
      %v875 = vlaneseq
      %v876 = vshrl.u32 %v875, 7
      %v877 = vsub.s32 %v874, %v876
      %v878 = vrot.slane %v864, %v877
      %v879 = vcombine.low %v846, %v862
      %v880 = vcombine.high %v846, %v862
      %v882 = vunpack.c.l.s4 1934713408
      %v883 = vunpack.c.0.s8 %v882
      %v884 = vlaneseq
      %v885 = vshrl.u32 %v884, 7
      %v886 = vsub.s32 %v883, %v885
      %v887 = vrot.slane %v879, %v886
      %v889 = vunpack.c.l.s4 1934713408
      %v890 = vunpack.c.0.s8 %v889
      %v891 = vlaneseq
      %v892 = vshrl.u32 %v891, 7
      %v893 = vsub.s32 %v890, %v892
      %v894 = vrot.slane %v880, %v893
      %v895 = vcombine.high %v871, 0.0
      %v896 = vcombine.high %v878, 0.0
      %v897 = vcombine.high %v887, 0.0
      %v898 = vcombine.high %v894, 0.0
      %v899 = vcombine.low %v871, %v878
      %v901 = vunpack.c.l.s4 1983009808
      %v902 = vunpack.c.0.s8 %v901
      %v903 = vlaneseq
      %v904 = vshrl.u32 %v903, 7
      %v905 = vsub.s32 %v902, %v904
      %v906 = vrot.slane %v899, %v905
      %v907 = vcombine.low %v895, %v896
      %v909 = vunpack.c.l.s4 1983009808
      %v910 = vunpack.c.0.s8 %v909
      %v911 = vlaneseq
      %v912 = vshrl.u32 %v911, 7
      %v913 = vsub.s32 %v910, %v912
      %v914 = vrot.slane %v907, %v913
      %v915 = vcombine.low %v887, %v894
      %v917 = vunpack.c.l.s4 1983009808
      %v918 = vunpack.c.0.s8 %v917
      %v919 = vlaneseq
      %v920 = vshrl.u32 %v919, 7
      %v921 = vsub.s32 %v918, %v920
      %v922 = vrot.slane %v915, %v921
      %v923 = vcombine.low %v897, %v898
      %v925 = vunpack.c.l.s4 1983009808
      %v926 = vunpack.c.0.s8 %v925
      %v927 = vlaneseq
      %v928 = vshrl.u32 %v927, 7
      %v929 = vsub.s32 %v926, %v928
      %v930 = vrot.slane %v923, %v929
      %v931 = vcombine.low %v906, %v914
      %v932 = vcombine.high %v906, %v914
      %v934 = vunpack.c.l.s4 1934713408
      %v935 = vunpack.c.0.s8 %v934
      %v936 = vlaneseq
      %v937 = vshrl.u32 %v936, 7
      %v938 = vsub.s32 %v935, %v937
      %v939 = vrot.slane %v931, %v938
      %v941 = vunpack.c.l.s4 1934713408
      %v942 = vunpack.c.0.s8 %v941
      %v943 = vlaneseq
      %v944 = vshrl.u32 %v943, 7
      %v945 = vsub.s32 %v942, %v944
      %v946 = vrot.slane %v932, %v945
      %v947 = vcombine.low %v922, %v930
      %v948 = vcombine.high %v922, %v930
      %v950 = vunpack.c.l.s4 1934713408
      %v951 = vunpack.c.0.s8 %v950
      %v952 = vlaneseq
      %v953 = vshrl.u32 %v952, 7
      %v954 = vsub.s32 %v951, %v953
      %v955 = vrot.slane %v947, %v954
      %v957 = vunpack.c.l.s4 1934713408
      %v958 = vunpack.c.0.s8 %v957
      %v959 = vlaneseq
      %v960 = vshrl.u32 %v959, 7
      %v961 = vsub.s32 %v958, %v960
      %v962 = vrot.slane %v948, %v961
      %v963 = vcombine.low %v939, %v955
      %v964 = vcombine.high %v939, %v955
      %v965 = vcombine.low %v946, %v962
      %v966 = vcombine.high %v946, %v962
      %vm967 = vcmask 64512
      %v969 = vsel %vm967, %v653, 0
      %v972 = vsel %vm967, %v808, 0
      %974 = vmatprep.subr.mxu0 0.0
      %975 = vmatpush1.xpose.msra.mxu0 %v972
      %976 = vmatprep.subr.mxu0 0.0
      %977 = vmatpush1.xpose.msra.mxu0 0.0
      %978 = vmatprep.subr.mxu0 0.0
      %979 = vmatpush1.xpose.msra.mxu0 0.0
      %980 = vmatprep.subr.mxu0 0.0
      %981 = vmatpush1.xpose.msra.mxu0 0.0
      %982 = vmatprep.subr.mxu0 0.0
      %983 = vmatpush1.xpose.msra.mxu0 0.0
      %984 = vmatprep.subr.mxu0 0.0
      %985 = vmatpush1.xpose.msra.mxu0 0.0
      %986 = vmatprep.subr.mxu0 0.0
      %987 = vmatpush1.xpose.msra.mxu0 0.0
      %988 = vmatprep.subr.mxu0 0.0
      %989 = vmatpush1.xpose.msra.mxu0 0.0
      %990 = vmatprep.subr.mxu0 0.0
      %991 = vmatpush1.xpose.msra.mxu0 0.0
      %992 = vmatprep.subr.mxu0 0.0
      %993 = vmatpush1.xpose.msra.mxu0 0.0
      %994 = vmatprep.subr.mxu0 0.0
      %995 = vmatpush1.xpose.msra.mxu0 0.0
      %996 = vmatprep.subr.mxu0 0.0
      %997 = vmatpush1.xpose.msra.mxu0 0.0
      %998 = vmatprep.subr.mxu0 0.0
      %999 = vmatpush1.xpose.msra.mxu0 0.0
      %1000 = vmatprep.subr.mxu0 0.0
      %1001 = vmatpush1.xpose.msra.mxu0 0.0
      %1002 = vmatprep.subr.mxu0 0.0
      %1003 = vmatpush1.xpose.msra.mxu0 0.0
      %1004 = vmatprep.subr.mxu0 0.0
      %1005 = vmatpush1.xpose.msra.mxu0 0.0
      %1006 = vmatprep.subr.mxu0 0.0
      %1007 = vmatpush1.xpose.msra.mxu0 0.0
      %1008 = vmatprep.subr.mxu0 0.0
      %1009 = vmatpush1.xpose.msra.mxu0 0.0
      %1010 = vmatprep.subr.mxu0 0.0
      %1011 = vmatpush1.xpose.msra.mxu0 0.0
      %1012 = vmatprep.subr.mxu0 0.0
      %1013 = vmatpush1.xpose.msra.mxu0 0.0
      %1014 = vmatprep.subr.mxu0 0.0
      %1015 = vmatpush1.xpose.msra.mxu0 0.0
      %1016 = vmatprep.subr.mxu0 0.0
      %1017 = vmatpush1.xpose.msra.mxu0 0.0
      %1018 = vmatprep.subr.mxu0 0.0
      %1019 = vmatpush1.xpose.msra.mxu0 0.0
      %1020 = vmatprep.subr.mxu0 0.0
      %1021 = vmatpush1.xpose.msra.mxu0 0.0
      %1022 = vmatprep.subr.mxu0 0.0
      %1023 = vmatpush1.xpose.msra.mxu0 0.0
      %1024 = vmatprep.subr.mxu0 0.0
      %1025 = vmatpush1.xpose.msra.mxu0 0.0
      %1026 = vmatprep.subr.mxu0 0.0
      %1027 = vmatpush1.xpose.msra.mxu0 0.0
      %1028 = vmatprep.subr.mxu0 0.0
      %1029 = vmatpush1.xpose.msra.mxu0 0.0
      %1030 = vmatprep.subr.mxu0 0.0
      %1031 = vmatpush1.xpose.msra.mxu0 0.0
      %1032 = vmatprep.subr.mxu0 0.0
      %1033 = vmatpush1.xpose.msra.mxu0 0.0
      %1034 = vmatprep.subr.mxu0 0.0
      %1035 = vmatpush1.xpose.msra.mxu0 0.0
      %1036 = vmatprep.subr.mxu0 0.0
      %1037 = vmatpush1.xpose.msra.mxu0 0.0
      %1038 = vmatprep.mubr.f32.mxu0 0.0
      %1039 = vmatmul.mubr.f32.gmra.mrb[0].mxu0 %v969
      %v1040 = vpop.f32.mrb[0].mxu0
      %v1041 = vadd.f32 0.0, %v1040
      %v1042 = vpop.f32.mrb[0].mxu0
      %1043 = vdwg.mxu0
      %v1045 = vsel %vm967, %v654, 0
      %v1048 = vsel %vm967, %v809, 0
      %1050 = vmatprep.subr.mxu0 0.0
      %1051 = vmatpush1.xpose.msra.mxu0 %v1048
      %1052 = vmatprep.subr.mxu0 0.0
      %1053 = vmatpush1.xpose.msra.mxu0 0.0
      %1054 = vmatprep.subr.mxu0 0.0
      %1055 = vmatpush1.xpose.msra.mxu0 0.0
      %1056 = vmatprep.subr.mxu0 0.0
      %1057 = vmatpush1.xpose.msra.mxu0 0.0
      %1058 = vmatprep.subr.mxu0 0.0
      %1059 = vmatpush1.xpose.msra.mxu0 0.0
      %1060 = vmatprep.subr.mxu0 0.0
      %1061 = vmatpush1.xpose.msra.mxu0 0.0
      %1062 = vmatprep.subr.mxu0 0.0
      %1063 = vmatpush1.xpose.msra.mxu0 0.0
      %1064 = vmatprep.subr.mxu0 0.0
      %1065 = vmatpush1.xpose.msra.mxu0 0.0
      %1066 = vmatprep.subr.mxu0 0.0
      %1067 = vmatpush1.xpose.msra.mxu0 0.0
      %1068 = vmatprep.subr.mxu0 0.0
      %1069 = vmatpush1.xpose.msra.mxu0 0.0
      %1070 = vmatprep.subr.mxu0 0.0
      %1071 = vmatpush1.xpose.msra.mxu0 0.0
      %1072 = vmatprep.subr.mxu0 0.0
      %1073 = vmatpush1.xpose.msra.mxu0 0.0
      %1074 = vmatprep.subr.mxu0 0.0
      %1075 = vmatpush1.xpose.msra.mxu0 0.0
      %1076 = vmatprep.subr.mxu0 0.0
      %1077 = vmatpush1.xpose.msra.mxu0 0.0
      %1078 = vmatprep.subr.mxu0 0.0
      %1079 = vmatpush1.xpose.msra.mxu0 0.0
      %1080 = vmatprep.subr.mxu0 0.0
      %1081 = vmatpush1.xpose.msra.mxu0 0.0
      %1082 = vmatprep.subr.mxu0 0.0
      %1083 = vmatpush1.xpose.msra.mxu0 0.0
      %1084 = vmatprep.subr.mxu0 0.0
      %1085 = vmatpush1.xpose.msra.mxu0 0.0
      %1086 = vmatprep.subr.mxu0 0.0
      %1087 = vmatpush1.xpose.msra.mxu0 0.0
      %1088 = vmatprep.subr.mxu0 0.0
      %1089 = vmatpush1.xpose.msra.mxu0 0.0
      %1090 = vmatprep.subr.mxu0 0.0
      %1091 = vmatpush1.xpose.msra.mxu0 0.0
      %1092 = vmatprep.subr.mxu0 0.0
      %1093 = vmatpush1.xpose.msra.mxu0 0.0
      %1094 = vmatprep.subr.mxu0 0.0
      %1095 = vmatpush1.xpose.msra.mxu0 0.0
      %1096 = vmatprep.subr.mxu0 0.0
      %1097 = vmatpush1.xpose.msra.mxu0 0.0
      %1098 = vmatprep.subr.mxu0 0.0
      %1099 = vmatpush1.xpose.msra.mxu0 0.0
      %1100 = vmatprep.subr.mxu0 0.0
      %1101 = vmatpush1.xpose.msra.mxu0 0.0
      %1102 = vmatprep.subr.mxu0 0.0
      %1103 = vmatpush1.xpose.msra.mxu0 0.0
      %1104 = vmatprep.subr.mxu0 0.0
      %1105 = vmatpush1.xpose.msra.mxu0 0.0
      %1106 = vmatprep.subr.mxu0 0.0
      %1107 = vmatpush1.xpose.msra.mxu0 0.0
      %1108 = vmatprep.subr.mxu0 0.0
      %1109 = vmatpush1.xpose.msra.mxu0 0.0
      %1110 = vmatprep.subr.mxu0 0.0
      %1111 = vmatpush1.xpose.msra.mxu0 0.0
      %1112 = vmatprep.subr.mxu0 0.0
      %1113 = vmatpush1.xpose.msra.mxu0 0.0
      %1114 = vmatprep.mubr.f32.mxu0 0.0
      %1115 = vmatmul.mubr.f32.gmra.mrb[0].mxu0 %v1045
      %v1116 = vpop.f32.mrb[0].mxu0
      %v1117 = vadd.f32 0.0, %v1116
      %v1118 = vpop.f32.mrb[0].mxu0
      %1119 = vdwg.mxu0
      %v1121 = vsel %vm967, %v655, 0
      %v1124 = vsel %vm967, %v810, 0
      %1126 = vmatprep.subr.mxu0 0.0
      %1127 = vmatpush1.xpose.msra.mxu0 %v1124
      %1128 = vmatprep.subr.mxu0 0.0
      %1129 = vmatpush1.xpose.msra.mxu0 0.0
      %1130 = vmatprep.subr.mxu0 0.0
      %1131 = vmatpush1.xpose.msra.mxu0 0.0
      %1132 = vmatprep.subr.mxu0 0.0
      %1133 = vmatpush1.xpose.msra.mxu0 0.0
      %1134 = vmatprep.subr.mxu0 0.0
      %1135 = vmatpush1.xpose.msra.mxu0 0.0
      %1136 = vmatprep.subr.mxu0 0.0
      %1137 = vmatpush1.xpose.msra.mxu0 0.0
      %1138 = vmatprep.subr.mxu0 0.0
      %1139 = vmatpush1.xpose.msra.mxu0 0.0
      %1140 = vmatprep.subr.mxu0 0.0
      %1141 = vmatpush1.xpose.msra.mxu0 0.0
      %1142 = vmatprep.subr.mxu0 0.0
      %1143 = vmatpush1.xpose.msra.mxu0 0.0
      %1144 = vmatprep.subr.mxu0 0.0
      %1145 = vmatpush1.xpose.msra.mxu0 0.0
      %1146 = vmatprep.subr.mxu0 0.0
      %1147 = vmatpush1.xpose.msra.mxu0 0.0
      %1148 = vmatprep.subr.mxu0 0.0
      %1149 = vmatpush1.xpose.msra.mxu0 0.0
      %1150 = vmatprep.subr.mxu0 0.0
      %1151 = vmatpush1.xpose.msra.mxu0 0.0
      %1152 = vmatprep.subr.mxu0 0.0
      %1153 = vmatpush1.xpose.msra.mxu0 0.0
      %1154 = vmatprep.subr.mxu0 0.0
      %1155 = vmatpush1.xpose.msra.mxu0 0.0
      %1156 = vmatprep.subr.mxu0 0.0
      %1157 = vmatpush1.xpose.msra.mxu0 0.0
      %1158 = vmatprep.subr.mxu0 0.0
      %1159 = vmatpush1.xpose.msra.mxu0 0.0
      %1160 = vmatprep.subr.mxu0 0.0
      %1161 = vmatpush1.xpose.msra.mxu0 0.0
      %1162 = vmatprep.subr.mxu0 0.0
      %1163 = vmatpush1.xpose.msra.mxu0 0.0
      %1164 = vmatprep.subr.mxu0 0.0
      %1165 = vmatpush1.xpose.msra.mxu0 0.0
      %1166 = vmatprep.subr.mxu0 0.0
      %1167 = vmatpush1.xpose.msra.mxu0 0.0
      %1168 = vmatprep.subr.mxu0 0.0
      %1169 = vmatpush1.xpose.msra.mxu0 0.0
      %1170 = vmatprep.subr.mxu0 0.0
      %1171 = vmatpush1.xpose.msra.mxu0 0.0
      %1172 = vmatprep.subr.mxu0 0.0
      %1173 = vmatpush1.xpose.msra.mxu0 0.0
      %1174 = vmatprep.subr.mxu0 0.0
      %1175 = vmatpush1.xpose.msra.mxu0 0.0
      %1176 = vmatprep.subr.mxu0 0.0
      %1177 = vmatpush1.xpose.msra.mxu0 0.0
      %1178 = vmatprep.subr.mxu0 0.0
      %1179 = vmatpush1.xpose.msra.mxu0 0.0
      %1180 = vmatprep.subr.mxu0 0.0
      %1181 = vmatpush1.xpose.msra.mxu0 0.0
      %1182 = vmatprep.subr.mxu0 0.0
      %1183 = vmatpush1.xpose.msra.mxu0 0.0
      %1184 = vmatprep.subr.mxu0 0.0
      %1185 = vmatpush1.xpose.msra.mxu0 0.0
      %1186 = vmatprep.subr.mxu0 0.0
      %1187 = vmatpush1.xpose.msra.mxu0 0.0
      %1188 = vmatprep.subr.mxu0 0.0
      %1189 = vmatpush1.xpose.msra.mxu0 0.0
      %1190 = vmatprep.mubr.f32.mxu0 0.0
      %1191 = vmatmul.mubr.f32.gmra.mrb[0].mxu0 %v1121
      %v1192 = vpop.f32.mrb[0].mxu0
      %v1193 = vadd.f32 0.0, %v1192
      %v1194 = vpop.f32.mrb[0].mxu0
      %1195 = vdwg.mxu0
      %v1197 = vsel %vm967, %v656, 0
      %v1200 = vsel %vm967, %v811, 0
      %1202 = vmatprep.subr.mxu0 0.0
      %1203 = vmatpush1.xpose.msra.mxu0 %v1200
      %1204 = vmatprep.subr.mxu0 0.0
      %1205 = vmatpush1.xpose.msra.mxu0 0.0
      %1206 = vmatprep.subr.mxu0 0.0
      %1207 = vmatpush1.xpose.msra.mxu0 0.0
      %1208 = vmatprep.subr.mxu0 0.0
      %1209 = vmatpush1.xpose.msra.mxu0 0.0
      %1210 = vmatprep.subr.mxu0 0.0
      %1211 = vmatpush1.xpose.msra.mxu0 0.0
      %1212 = vmatprep.subr.mxu0 0.0
      %1213 = vmatpush1.xpose.msra.mxu0 0.0
      %1214 = vmatprep.subr.mxu0 0.0
      %1215 = vmatpush1.xpose.msra.mxu0 0.0
      %1216 = vmatprep.subr.mxu0 0.0
      %1217 = vmatpush1.xpose.msra.mxu0 0.0
      %1218 = vmatprep.subr.mxu0 0.0
      %1219 = vmatpush1.xpose.msra.mxu0 0.0
      %1220 = vmatprep.subr.mxu0 0.0
      %1221 = vmatpush1.xpose.msra.mxu0 0.0
      %1222 = vmatprep.subr.mxu0 0.0
      %1223 = vmatpush1.xpose.msra.mxu0 0.0
      %1224 = vmatprep.subr.mxu0 0.0
      %1225 = vmatpush1.xpose.msra.mxu0 0.0
      %1226 = vmatprep.subr.mxu0 0.0
      %1227 = vmatpush1.xpose.msra.mxu0 0.0
      %1228 = vmatprep.subr.mxu0 0.0
      %1229 = vmatpush1.xpose.msra.mxu0 0.0
      %1230 = vmatprep.subr.mxu0 0.0
      %1231 = vmatpush1.xpose.msra.mxu0 0.0
      %1232 = vmatprep.subr.mxu0 0.0
      %1233 = vmatpush1.xpose.msra.mxu0 0.0
      %1234 = vmatprep.subr.mxu0 0.0
      %1235 = vmatpush1.xpose.msra.mxu0 0.0
      %1236 = vmatprep.subr.mxu0 0.0
      %1237 = vmatpush1.xpose.msra.mxu0 0.0
      %1238 = vmatprep.subr.mxu0 0.0
      %1239 = vmatpush1.xpose.msra.mxu0 0.0
      %1240 = vmatprep.subr.mxu0 0.0
      %1241 = vmatpush1.xpose.msra.mxu0 0.0
      %1242 = vmatprep.subr.mxu0 0.0
      %1243 = vmatpush1.xpose.msra.mxu0 0.0
      %1244 = vmatprep.subr.mxu0 0.0
      %1245 = vmatpush1.xpose.msra.mxu0 0.0
      %1246 = vmatprep.subr.mxu0 0.0
      %1247 = vmatpush1.xpose.msra.mxu0 0.0
      %1248 = vmatprep.subr.mxu0 0.0
      %1249 = vmatpush1.xpose.msra.mxu0 0.0
      %1250 = vmatprep.subr.mxu0 0.0
      %1251 = vmatpush1.xpose.msra.mxu0 0.0
      %1252 = vmatprep.subr.mxu0 0.0
      %1253 = vmatpush1.xpose.msra.mxu0 0.0
      %1254 = vmatprep.subr.mxu0 0.0
      %1255 = vmatpush1.xpose.msra.mxu0 0.0
      %1256 = vmatprep.subr.mxu0 0.0
      %1257 = vmatpush1.xpose.msra.mxu0 0.0
      %1258 = vmatprep.subr.mxu0 0.0
      %1259 = vmatpush1.xpose.msra.mxu0 0.0
      %1260 = vmatprep.subr.mxu0 0.0
      %1261 = vmatpush1.xpose.msra.mxu0 0.0
      %1262 = vmatprep.subr.mxu0 0.0
      %1263 = vmatpush1.xpose.msra.mxu0 0.0
      %1264 = vmatprep.subr.mxu0 0.0
      %1265 = vmatpush1.xpose.msra.mxu0 0.0
      %1266 = vmatprep.mubr.f32.mxu0 0.0
      %1267 = vmatmul.mubr.f32.gmra.mrb[0].mxu0 %v1197
      %v1268 = vpop.f32.mrb[0].mxu0
      %v1269 = vadd.f32 0.0, %v1268
      %v1270 = vpop.f32.mrb[0].mxu0
      %1271 = vdwg.mxu0
      %v1272 = vsel %vm967, %v1041, -inf
      %1273 = vmax.xlane.f32.xlu0 %v1272
      %v1274 = vpop.xlane.xlu0 %1273
      %v1275 = vsel %vm967, %v1117, -inf
      %1276 = vmax.xlane.f32.xlu0 %v1275
      %v1277 = vpop.xlane.xlu0 %1276
      %v1278 = vsel %vm967, %v1193, -inf
      %1279 = vmax.xlane.f32.xlu0 %v1278
      %v1280 = vpop.xlane.xlu0 %1279
      %v1281 = vsel %vm967, %v1269, -inf
      %1282 = vmax.xlane.f32.xlu0 %v1281
      %v1283 = vpop.xlane.xlu0 %1282
      %v1284 = vsub.f32 %v1041, %v1274
      %v1285 = vsub.f32 %v1117, %v1277
      %v1286 = vsub.f32 %v1193, %v1280
      %v1287 = vsub.f32 %v1269, %v1283
      %v1288 = vmul.f32 %v1284, 1.442695
      %v1289 = vpow.pop %v1288
      %v1290 = vmul.f32 %v1285, 1.442695
      %v1291 = vpow.pop %v1290
      %v1292 = vmul.f32 %v1286, 1.442695
      %v1293 = vpow.pop %v1292
      %v1294 = vmul.f32 %v1287, 1.442695
      %v1295 = vpow.pop %v1294
      %v1296 = vsel %vm967, %v1289, 0.0
      %1297 = vadd.xlane.f32.xlu0 %v1296
      %v1298 = vpop.xlane.xlu0 %1297
      %v1299 = vsel %vm967, %v1291, 0.0
      %1300 = vadd.xlane.f32.xlu0 %v1299
      %v1301 = vpop.xlane.xlu0 %1300
      %v1302 = vsel %vm967, %v1293, 0.0
      %1303 = vadd.xlane.f32.xlu0 %v1302
      %v1304 = vpop.xlane.xlu0 %1303
      %v1305 = vsel %vm967, %v1295, 0.0
      %1306 = vadd.xlane.f32.xlu0 %v1305
      %v1307 = vpop.xlane.xlu0 %1306
      %v1309 = vsel %vm967, %v1289, 0
      %1311 = vmatprep.subr.mxu0 0.0
      %1312 = vmatpush1.msra.mxu0 %v963
      %1313 = vmatprep.subr.mxu0 0.0
      %1314 = vmatpush1.msra.mxu0 0.0
      %1315 = vmatprep.subr.mxu0 0.0
      %1316 = vmatpush1.msra.mxu0 0.0
      %1317 = vmatprep.subr.mxu0 0.0
      %1318 = vmatpush1.msra.mxu0 0.0
      %1319 = vmatprep.subr.mxu0 0.0
      %1320 = vmatpush1.msra.mxu0 0.0
      %1321 = vmatprep.subr.mxu0 0.0
      %1322 = vmatpush1.msra.mxu0 0.0
      %1323 = vmatprep.subr.mxu0 0.0
      %1324 = vmatpush1.msra.mxu0 0.0
      %1325 = vmatprep.subr.mxu0 0.0
      %1326 = vmatpush1.msra.mxu0 0.0
      %1327 = vmatprep.subr.mxu0 0.0
      %1328 = vmatpush1.msra.mxu0 0.0
      %1329 = vmatprep.subr.mxu0 0.0
      %1330 = vmatpush1.msra.mxu0 0.0
      %1331 = vmatprep.subr.mxu0 0.0
      %1332 = vmatpush1.msra.mxu0 0.0
      %1333 = vmatprep.subr.mxu0 0.0
      %1334 = vmatpush1.msra.mxu0 0.0
      %1335 = vmatprep.subr.mxu0 0.0
      %1336 = vmatpush1.msra.mxu0 0.0
      %1337 = vmatprep.subr.mxu0 0.0
      %1338 = vmatpush1.msra.mxu0 0.0
      %1339 = vmatprep.subr.mxu0 0.0
      %1340 = vmatpush1.msra.mxu0 0.0
      %1341 = vmatprep.subr.mxu0 0.0
      %1342 = vmatpush1.msra.mxu0 0.0
      %1343 = vmatprep.subr.mxu0 0.0
      %1344 = vmatpush1.msra.mxu0 0.0
      %1345 = vmatprep.subr.mxu0 0.0
      %1346 = vmatpush1.msra.mxu0 0.0
      %1347 = vmatprep.subr.mxu0 0.0
      %1348 = vmatpush1.msra.mxu0 0.0
      %1349 = vmatprep.subr.mxu0 0.0
      %1350 = vmatpush1.msra.mxu0 0.0
      %1351 = vmatprep.subr.mxu0 0.0
      %1352 = vmatpush1.msra.mxu0 0.0
      %1353 = vmatprep.subr.mxu0 0.0
      %1354 = vmatpush1.msra.mxu0 0.0
      %1355 = vmatprep.subr.mxu0 0.0
      %1356 = vmatpush1.msra.mxu0 0.0
      %1357 = vmatprep.subr.mxu0 0.0
      %1358 = vmatpush1.msra.mxu0 0.0
      %1359 = vmatprep.subr.mxu0 0.0
      %1360 = vmatpush1.msra.mxu0 0.0
      %1361 = vmatprep.subr.mxu0 0.0
      %1362 = vmatpush1.msra.mxu0 0.0
      %1363 = vmatprep.subr.mxu0 0.0
      %1364 = vmatpush1.msra.mxu0 0.0
      %1365 = vmatprep.subr.mxu0 0.0
      %1366 = vmatpush1.msra.mxu0 0.0
      %1367 = vmatprep.subr.mxu0 0.0
      %1368 = vmatpush1.msra.mxu0 0.0
      %1369 = vmatprep.subr.mxu0 0.0
      %1370 = vmatpush1.msra.mxu0 0.0
      %1371 = vmatprep.subr.mxu0 0.0
      %1372 = vmatpush1.msra.mxu0 0.0
      %1373 = vmatprep.subr.mxu0 0.0
      %1374 = vmatpush1.msra.mxu0 0.0
      %1375 = vmatprep.mubr.f32.mxu0 0.0
      %1376 = vmatmul.mubr.f32.gmra.mrb[0].mxu0 %v1309
      %v1377 = vpop.f32.mrb[0].mxu0
      %v1378 = vadd.f32 0.0, %v1377
      %v1379 = vpop.f32.mrb[0].mxu0
      %1380 = vdwg.mxu0
      %v1382 = vsel %vm967, %v1291, 0
      %1384 = vmatprep.subr.mxu0 0.0
      %1385 = vmatpush1.msra.mxu0 %v964
      %1386 = vmatprep.subr.mxu0 0.0
      %1387 = vmatpush1.msra.mxu0 0.0
      %1388 = vmatprep.subr.mxu0 0.0
      %1389 = vmatpush1.msra.mxu0 0.0
      %1390 = vmatprep.subr.mxu0 0.0
      %1391 = vmatpush1.msra.mxu0 0.0
      %1392 = vmatprep.subr.mxu0 0.0
      %1393 = vmatpush1.msra.mxu0 0.0
      %1394 = vmatprep.subr.mxu0 0.0
      %1395 = vmatpush1.msra.mxu0 0.0
      %1396 = vmatprep.subr.mxu0 0.0
      %1397 = vmatpush1.msra.mxu0 0.0
      %1398 = vmatprep.subr.mxu0 0.0
      %1399 = vmatpush1.msra.mxu0 0.0
      %1400 = vmatprep.subr.mxu0 0.0
      %1401 = vmatpush1.msra.mxu0 0.0
      %1402 = vmatprep.subr.mxu0 0.0
      %1403 = vmatpush1.msra.mxu0 0.0
      %1404 = vmatprep.subr.mxu0 0.0
      %1405 = vmatpush1.msra.mxu0 0.0
      %1406 = vmatprep.subr.mxu0 0.0
      %1407 = vmatpush1.msra.mxu0 0.0
      %1408 = vmatprep.subr.mxu0 0.0
      %1409 = vmatpush1.msra.mxu0 0.0
      %1410 = vmatprep.subr.mxu0 0.0
      %1411 = vmatpush1.msra.mxu0 0.0
      %1412 = vmatprep.subr.mxu0 0.0
      %1413 = vmatpush1.msra.mxu0 0.0
      %1414 = vmatprep.subr.mxu0 0.0
      %1415 = vmatpush1.msra.mxu0 0.0
      %1416 = vmatprep.subr.mxu0 0.0
      %1417 = vmatpush1.msra.mxu0 0.0
      %1418 = vmatprep.subr.mxu0 0.0
      %1419 = vmatpush1.msra.mxu0 0.0
      %1420 = vmatprep.subr.mxu0 0.0
      %1421 = vmatpush1.msra.mxu0 0.0
      %1422 = vmatprep.subr.mxu0 0.0
      %1423 = vmatpush1.msra.mxu0 0.0
      %1424 = vmatprep.subr.mxu0 0.0
      %1425 = vmatpush1.msra.mxu0 0.0
      %1426 = vmatprep.subr.mxu0 0.0
      %1427 = vmatpush1.msra.mxu0 0.0
      %1428 = vmatprep.subr.mxu0 0.0
      %1429 = vmatpush1.msra.mxu0 0.0
      %1430 = vmatprep.subr.mxu0 0.0
      %1431 = vmatpush1.msra.mxu0 0.0
      %1432 = vmatprep.subr.mxu0 0.0
      %1433 = vmatpush1.msra.mxu0 0.0
      %1434 = vmatprep.subr.mxu0 0.0
      %1435 = vmatpush1.msra.mxu0 0.0
      %1436 = vmatprep.subr.mxu0 0.0
      %1437 = vmatpush1.msra.mxu0 0.0
      %1438 = vmatprep.subr.mxu0 0.0
      %1439 = vmatpush1.msra.mxu0 0.0
      %1440 = vmatprep.subr.mxu0 0.0
      %1441 = vmatpush1.msra.mxu0 0.0
      %1442 = vmatprep.subr.mxu0 0.0
      %1443 = vmatpush1.msra.mxu0 0.0
      %1444 = vmatprep.subr.mxu0 0.0
      %1445 = vmatpush1.msra.mxu0 0.0
      %1446 = vmatprep.subr.mxu0 0.0
      %1447 = vmatpush1.msra.mxu0 0.0
      %1448 = vmatprep.mubr.f32.mxu0 0.0
      %1449 = vmatmul.mubr.f32.gmra.mrb[0].mxu0 %v1382
      %v1450 = vpop.f32.mrb[0].mxu0
      %v1451 = vadd.f32 0.0, %v1450
      %v1452 = vpop.f32.mrb[0].mxu0
      %1453 = vdwg.mxu0
      %v1455 = vsel %vm967, %v1293, 0
      %1457 = vmatprep.subr.mxu0 0.0
      %1458 = vmatpush1.msra.mxu0 %v965
      %1459 = vmatprep.subr.mxu0 0.0
      %1460 = vmatpush1.msra.mxu0 0.0
      %1461 = vmatprep.subr.mxu0 0.0
      %1462 = vmatpush1.msra.mxu0 0.0
      %1463 = vmatprep.subr.mxu0 0.0
      %1464 = vmatpush1.msra.mxu0 0.0
      %1465 = vmatprep.subr.mxu0 0.0
      %1466 = vmatpush1.msra.mxu0 0.0
      %1467 = vmatprep.subr.mxu0 0.0
      %1468 = vmatpush1.msra.mxu0 0.0
      %1469 = vmatprep.subr.mxu0 0.0
      %1470 = vmatpush1.msra.mxu0 0.0
      %1471 = vmatprep.subr.mxu0 0.0
      %1472 = vmatpush1.msra.mxu0 0.0
      %1473 = vmatprep.subr.mxu0 0.0
      %1474 = vmatpush1.msra.mxu0 0.0
      %1475 = vmatprep.subr.mxu0 0.0
      %1476 = vmatpush1.msra.mxu0 0.0
      %1477 = vmatprep.subr.mxu0 0.0
      %1478 = vmatpush1.msra.mxu0 0.0
      %1479 = vmatprep.subr.mxu0 0.0
      %1480 = vmatpush1.msra.mxu0 0.0
      %1481 = vmatprep.subr.mxu0 0.0
      %1482 = vmatpush1.msra.mxu0 0.0
      %1483 = vmatprep.subr.mxu0 0.0
      %1484 = vmatpush1.msra.mxu0 0.0
      %1485 = vmatprep.subr.mxu0 0.0
      %1486 = vmatpush1.msra.mxu0 0.0
      %1487 = vmatprep.subr.mxu0 0.0
      %1488 = vmatpush1.msra.mxu0 0.0
      %1489 = vmatprep.subr.mxu0 0.0
      %1490 = vmatpush1.msra.mxu0 0.0
      %1491 = vmatprep.subr.mxu0 0.0
      %1492 = vmatpush1.msra.mxu0 0.0
      %1493 = vmatprep.subr.mxu0 0.0
      %1494 = vmatpush1.msra.mxu0 0.0
      %1495 = vmatprep.subr.mxu0 0.0
      %1496 = vmatpush1.msra.mxu0 0.0
      %1497 = vmatprep.subr.mxu0 0.0
      %1498 = vmatpush1.msra.mxu0 0.0
      %1499 = vmatprep.subr.mxu0 0.0
      %1500 = vmatpush1.msra.mxu0 0.0
      %1501 = vmatprep.subr.mxu0 0.0
      %1502 = vmatpush1.msra.mxu0 0.0
      %1503 = vmatprep.subr.mxu0 0.0
      %1504 = vmatpush1.msra.mxu0 0.0
      %1505 = vmatprep.subr.mxu0 0.0
      %1506 = vmatpush1.msra.mxu0 0.0
      %1507 = vmatprep.subr.mxu0 0.0
      %1508 = vmatpush1.msra.mxu0 0.0
      %1509 = vmatprep.subr.mxu0 0.0
      %1510 = vmatpush1.msra.mxu0 0.0
      %1511 = vmatprep.subr.mxu0 0.0
      %1512 = vmatpush1.msra.mxu0 0.0
      %1513 = vmatprep.subr.mxu0 0.0
      %1514 = vmatpush1.msra.mxu0 0.0
      %1515 = vmatprep.subr.mxu0 0.0
      %1516 = vmatpush1.msra.mxu0 0.0
      %1517 = vmatprep.subr.mxu0 0.0
      %1518 = vmatpush1.msra.mxu0 0.0
      %1519 = vmatprep.subr.mxu0 0.0
      %1520 = vmatpush1.msra.mxu0 0.0
      %1521 = vmatprep.mubr.f32.mxu0 0.0
      %1522 = vmatmul.mubr.f32.gmra.mrb[0].mxu0 %v1455
      %v1523 = vpop.f32.mrb[0].mxu0
      %v1524 = vadd.f32 0.0, %v1523
      %v1525 = vpop.f32.mrb[0].mxu0
      %1526 = vdwg.mxu0
      %v1528 = vsel %vm967, %v1295, 0
      %1530 = vmatprep.subr.mxu0 0.0
      %1531 = vmatpush1.msra.mxu0 %v966
      %1532 = vmatprep.subr.mxu0 0.0
      %1533 = vmatpush1.msra.mxu0 0.0
      %1534 = vmatprep.subr.mxu0 0.0
      %1535 = vmatpush1.msra.mxu0 0.0
      %1536 = vmatprep.subr.mxu0 0.0
      %1537 = vmatpush1.msra.mxu0 0.0
      %1538 = vmatprep.subr.mxu0 0.0
      %1539 = vmatpush1.msra.mxu0 0.0
      %1540 = vmatprep.subr.mxu0 0.0
      %1541 = vmatpush1.msra.mxu0 0.0
      %1542 = vmatprep.subr.mxu0 0.0
      %1543 = vmatpush1.msra.mxu0 0.0
      %1544 = vmatprep.subr.mxu0 0.0
      %1545 = vmatpush1.msra.mxu0 0.0
      %1546 = vmatprep.subr.mxu0 0.0
      %1547 = vmatpush1.msra.mxu0 0.0
      %1548 = vmatprep.subr.mxu0 0.0
      %1549 = vmatpush1.msra.mxu0 0.0
      %1550 = vmatprep.subr.mxu0 0.0
      %1551 = vmatpush1.msra.mxu0 0.0
      %1552 = vmatprep.subr.mxu0 0.0
      %1553 = vmatpush1.msra.mxu0 0.0
      %1554 = vmatprep.subr.mxu0 0.0
      %1555 = vmatpush1.msra.mxu0 0.0
      %1556 = vmatprep.subr.mxu0 0.0
      %1557 = vmatpush1.msra.mxu0 0.0
      %1558 = vmatprep.subr.mxu0 0.0
      %1559 = vmatpush1.msra.mxu0 0.0
      %1560 = vmatprep.subr.mxu0 0.0
      %1561 = vmatpush1.msra.mxu0 0.0
      %1562 = vmatprep.subr.mxu0 0.0
      %1563 = vmatpush1.msra.mxu0 0.0
      %1564 = vmatprep.subr.mxu0 0.0
      %1565 = vmatpush1.msra.mxu0 0.0
      %1566 = vmatprep.subr.mxu0 0.0
      %1567 = vmatpush1.msra.mxu0 0.0
      %1568 = vmatprep.subr.mxu0 0.0
      %1569 = vmatpush1.msra.mxu0 0.0
      %1570 = vmatprep.subr.mxu0 0.0
      %1571 = vmatpush1.msra.mxu0 0.0
      %1572 = vmatprep.subr.mxu0 0.0
      %1573 = vmatpush1.msra.mxu0 0.0
      %1574 = vmatprep.subr.mxu0 0.0
      %1575 = vmatpush1.msra.mxu0 0.0
      %1576 = vmatprep.subr.mxu0 0.0
      %1577 = vmatpush1.msra.mxu0 0.0
      %1578 = vmatprep.subr.mxu0 0.0
      %1579 = vmatpush1.msra.mxu0 0.0
      %1580 = vmatprep.subr.mxu0 0.0
      %1581 = vmatpush1.msra.mxu0 0.0
      %1582 = vmatprep.subr.mxu0 0.0
      %1583 = vmatpush1.msra.mxu0 0.0
      %1584 = vmatprep.subr.mxu0 0.0
      %1585 = vmatpush1.msra.mxu0 0.0
      %1586 = vmatprep.subr.mxu0 0.0
      %1587 = vmatpush1.msra.mxu0 0.0
      %1588 = vmatprep.subr.mxu0 0.0
      %1589 = vmatpush1.msra.mxu0 0.0
      %1590 = vmatprep.subr.mxu0 0.0
      %1591 = vmatpush1.msra.mxu0 0.0
      %1592 = vmatprep.subr.mxu0 0.0
      %1593 = vmatpush1.msra.mxu0 0.0
      %1594 = vmatprep.mubr.f32.mxu0 0.0
      %1595 = vmatmul.mubr.f32.gmra.mrb[0].mxu0 %v1528
      %v1596 = vpop.f32.mrb[0].mxu0
      %v1597 = vadd.f32 0.0, %v1596
      %v1598 = vpop.f32.mrb[0].mxu0
      %1599 = vdwg.mxu0
      %v1600 = vrcp.pop %v1298
      %v1601 = vrcp.pop %v1301
      %v1602 = vrcp.pop %v1304
      %v1603 = vrcp.pop %v1307
      %v1604 = vmul.f32 %v1298, %v1600
      %v1605 = vmul.f32 %v1301, %v1601
      %v1606 = vmul.f32 %v1304, %v1602
      %v1607 = vmul.f32 %v1307, %v1603
      %v1608 = vsub.f32 2.0, %v1604
      %v1609 = vsub.f32 2.0, %v1605
      %v1610 = vsub.f32 2.0, %v1606
      %v1611 = vsub.f32 2.0, %v1607
      %v1612 = vmul.f32 %v1600, %v1608
      %v1613 = vmul.f32 %v1601, %v1609
      %v1614 = vmul.f32 %v1602, %v1610
      %v1615 = vmul.f32 %v1603, %v1611
      %v1616 = vmul.f32 %v1378, %v1612
      %v1617 = vmul.f32 %v1451, %v1613
      %v1618 = vmul.f32 %v1524, %v1614
      %v1619 = vmul.f32 %v1597, %v1615
      %v1620 = vcombine.low %v1616, %v1618
      %v1621 = vcombine.high %v1616, %v1618
      %v1623 = vunpack.c.l.s4 1983009808
      %v1624 = vunpack.c.0.s8 %v1623
      %v1625 = vlaneseq
      %v1626 = vshrl.u32 %v1625, 7
      %v1627 = vsub.s32 %v1624, %v1626
      %v1628 = vrot.slane %v1620, %v1627
      %v1630 = vunpack.c.l.s4 1983009808
      %v1631 = vunpack.c.0.s8 %v1630
      %v1632 = vlaneseq
      %v1633 = vshrl.u32 %v1632, 7
      %v1634 = vsub.s32 %v1631, %v1633
      %v1635 = vrot.slane %v1621, %v1634
      %v1636 = vcombine.low %v1617, %v1619
      %v1637 = vcombine.high %v1617, %v1619
      %v1639 = vunpack.c.l.s4 1983009808
      %v1640 = vunpack.c.0.s8 %v1639
      %v1641 = vlaneseq
      %v1642 = vshrl.u32 %v1641, 7
      %v1643 = vsub.s32 %v1640, %v1642
      %v1644 = vrot.slane %v1636, %v1643
      %v1646 = vunpack.c.l.s4 1983009808
      %v1647 = vunpack.c.0.s8 %v1646
      %v1648 = vlaneseq
      %v1649 = vshrl.u32 %v1648, 7
      %v1650 = vsub.s32 %v1647, %v1649
      %v1651 = vrot.slane %v1637, %v1650
      %v1652 = vcombine.low %v1628, %v1644
      %v1653 = vcombine.high %v1628, %v1644
      %v1655 = vunpack.c.l.s4 1934713408
      %v1656 = vunpack.c.0.s8 %v1655
      %v1657 = vlaneseq
      %v1658 = vshrl.u32 %v1657, 7
      %v1659 = vsub.s32 %v1656, %v1658
      %v1660 = vrot.slane %v1652, %v1659
      %v1662 = vunpack.c.l.s4 1934713408
      %v1663 = vunpack.c.0.s8 %v1662
      %v1664 = vlaneseq
      %v1665 = vshrl.u32 %v1664, 7
      %v1666 = vsub.s32 %v1663, %v1665
      %v1667 = vrot.slane %v1653, %v1666
      %v1668 = vcombine.low %v1635, %v1651
      %v1669 = vcombine.high %v1635, %v1651
      %v1671 = vunpack.c.l.s4 1934713408
      %v1672 = vunpack.c.0.s8 %v1671
      %v1673 = vlaneseq
      %v1674 = vshrl.u32 %v1673, 7
      %v1675 = vsub.s32 %v1672, %v1674
      %v1676 = vrot.slane %v1668, %v1675
      %v1678 = vunpack.c.l.s4 1934713408
      %v1679 = vunpack.c.0.s8 %v1678
      %v1680 = vlaneseq
      %v1681 = vshrl.u32 %v1680, 7
      %v1682 = vsub.s32 %v1679, %v1681
      %v1683 = vrot.slane %v1669, %v1682
      %v1684 = vcombine.high %v1660, 0.0
      %v1685 = vcombine.high %v1667, 0.0
      %v1686 = vcombine.high %v1676, 0.0
      %v1687 = vcombine.high %v1683, 0.0
      %v1688 = vcombine.low %v1660, %v1667
      %v1690 = vunpack.c.l.s4 1983009808
      %v1691 = vunpack.c.0.s8 %v1690
      %v1692 = vlaneseq
      %v1693 = vshrl.u32 %v1692, 7
      %v1694 = vsub.s32 %v1691, %v1693
      %v1695 = vrot.slane %v1688, %v1694
      %v1696 = vcombine.low %v1684, %v1685
      %v1698 = vunpack.c.l.s4 1983009808
      %v1699 = vunpack.c.0.s8 %v1698
      %v1700 = vlaneseq
      %v1701 = vshrl.u32 %v1700, 7
      %v1702 = vsub.s32 %v1699, %v1701
      %v1703 = vrot.slane %v1696, %v1702
      %v1704 = vcombine.low %v1676, %v1683
      %v1706 = vunpack.c.l.s4 1983009808
      %v1707 = vunpack.c.0.s8 %v1706
      %v1708 = vlaneseq
      %v1709 = vshrl.u32 %v1708, 7
      %v1710 = vsub.s32 %v1707, %v1709
      %v1711 = vrot.slane %v1704, %v1710
      %v1712 = vcombine.low %v1686, %v1687
      %v1714 = vunpack.c.l.s4 1983009808
      %v1715 = vunpack.c.0.s8 %v1714
      %v1716 = vlaneseq
      %v1717 = vshrl.u32 %v1716, 7
      %v1718 = vsub.s32 %v1715, %v1717
      %v1719 = vrot.slane %v1712, %v1718
      %v1720 = vcombine.low %v1695, %v1703
      %v1721 = vcombine.high %v1695, %v1703
      %v1723 = vunpack.c.l.s4 1934713408
      %v1724 = vunpack.c.0.s8 %v1723
      %v1725 = vlaneseq
      %v1726 = vshrl.u32 %v1725, 7
      %v1727 = vsub.s32 %v1724, %v1726
      %v1728 = vrot.slane %v1720, %v1727
      %v1730 = vunpack.c.l.s4 1934713408
      %v1731 = vunpack.c.0.s8 %v1730
      %v1732 = vlaneseq
      %v1733 = vshrl.u32 %v1732, 7
      %v1734 = vsub.s32 %v1731, %v1733
      %v1735 = vrot.slane %v1721, %v1734
      %v1736 = vcombine.low %v1711, %v1719
      %v1737 = vcombine.high %v1711, %v1719
      %v1739 = vunpack.c.l.s4 1934713408
      %v1740 = vunpack.c.0.s8 %v1739
      %v1741 = vlaneseq
      %v1742 = vshrl.u32 %v1741, 7
      %v1743 = vsub.s32 %v1740, %v1742
      %v1744 = vrot.slane %v1736, %v1743
      %v1746 = vunpack.c.l.s4 1934713408
      %v1747 = vunpack.c.0.s8 %v1746
      %v1748 = vlaneseq
      %v1749 = vshrl.u32 %v1748, 7
      %v1750 = vsub.s32 %v1747, %v1749
      %v1751 = vrot.slane %v1737, %v1750
      %v1752 = vcombine.low %v1728, %v1744
      %v1753 = vcombine.high %v1728, %v1744
      %v1754 = vcombine.low %v1735, %v1751
      %v1755 = vcombine.high %v1735, %v1751
      %1757 = vrot.lane.b32.xlu0 %v1753, 8
      %v1758 = vpop.permute.xlu0 %1757
      %1761 = vrot.lane.b32.xlu0 %v1754, 16
      %v1762 = vpop.permute.xlu0 %1761
      %1765 = vrot.lane.b32.xlu0 %v1755, 24
      %v1766 = vpop.permute.xlu0 %1765
      %v1768 = vsel %vm967, %v1752, %v1758
      %vm1769 = vcmask 130048
      %v1770 = vsel %vm1769, %v1768, %v1762
      %vm1771 = vcmask 195584
      %v1772 = vsel %vm1771, %v1770, %v1766
      %v1773 = vld [vmem:[%s3] sm:$0xff]
      %v1774 = vld [vmem:[%s3 + $0x8] sm:$0xff]
      %v1775 = vld [vmem:[%s3 + $0x10] sm:$0xff]
      %v1776 = vld [vmem:[%s3 + $0x18] sm:$0xff]
      %v1777 = vlaneseq
      %v1778 = vshrl.u32 %v1777, 7
      %v1779 = vsub.s32 5, %v1778
      %v1780 = vrot.slane %v243, %v1779
      %v1782 = vsel %vm274, %v1772, 0
      %1784 = vmatprep.subr.mxu0 0.0
      %1785 = vmatpush1.msra.mxu0 %v1773
      %1786 = vmatprep.subr.mxu0 0.0
      %1787 = vmatpush1.msra.mxu0 %v1774
      %1788 = vmatprep.subr.mxu0 0.0
      %1789 = vmatpush1.msra.mxu0 %v1775
      %1790 = vmatprep.subr.mxu0 0.0
      %1791 = vmatpush1.msra.mxu0 %v1776
      %1792 = vmatprep.subr.mxu0 0.0
      %1793 = vmatpush1.msra.mxu0 0.0
      %1794 = vmatprep.subr.mxu0 0.0
      %1795 = vmatpush1.msra.mxu0 0.0
      %1796 = vmatprep.subr.mxu0 0.0
      %1797 = vmatpush1.msra.mxu0 0.0
      %1798 = vmatprep.subr.mxu0 0.0
      %1799 = vmatpush1.msra.mxu0 0.0
      %1800 = vmatprep.subr.mxu0 0.0
      %1801 = vmatpush1.msra.mxu0 0.0
      %1802 = vmatprep.subr.mxu0 0.0
      %1803 = vmatpush1.msra.mxu0 0.0
      %1804 = vmatprep.subr.mxu0 0.0
      %1805 = vmatpush1.msra.mxu0 0.0
      %1806 = vmatprep.subr.mxu0 0.0
      %1807 = vmatpush1.msra.mxu0 0.0
      %1808 = vmatprep.subr.mxu0 0.0
      %1809 = vmatpush1.msra.mxu0 0.0
      %1810 = vmatprep.subr.mxu0 0.0
      %1811 = vmatpush1.msra.mxu0 0.0
      %1812 = vmatprep.subr.mxu0 0.0
      %1813 = vmatpush1.msra.mxu0 0.0
      %1814 = vmatprep.subr.mxu0 0.0
      %1815 = vmatpush1.msra.mxu0 0.0
      %1816 = vmatprep.subr.mxu0 0.0
      %1817 = vmatpush1.msra.mxu0 0.0
      %1818 = vmatprep.subr.mxu0 0.0
      %1819 = vmatpush1.msra.mxu0 0.0
      %1820 = vmatprep.subr.mxu0 0.0
      %1821 = vmatpush1.msra.mxu0 0.0
      %1822 = vmatprep.subr.mxu0 0.0
      %1823 = vmatpush1.msra.mxu0 0.0
      %1824 = vmatprep.subr.mxu0 0.0
      %1825 = vmatpush1.msra.mxu0 0.0
      %1826 = vmatprep.subr.mxu0 0.0
      %1827 = vmatpush1.msra.mxu0 0.0
      %1828 = vmatprep.subr.mxu0 0.0
      %1829 = vmatpush1.msra.mxu0 0.0
      %1830 = vmatprep.subr.mxu0 0.0
      %1831 = vmatpush1.msra.mxu0 0.0
      %1832 = vmatprep.subr.mxu0 0.0
      %1833 = vmatpush1.msra.mxu0 0.0
      %1834 = vmatprep.subr.mxu0 0.0
      %1835 = vmatpush1.msra.mxu0 0.0
      %1836 = vmatprep.subr.mxu0 0.0
      %1837 = vmatpush1.msra.mxu0 0.0
      %1838 = vmatprep.subr.mxu0 0.0
      %1839 = vmatpush1.msra.mxu0 0.0
      %1840 = vmatprep.subr.mxu0 0.0
      %1841 = vmatpush1.msra.mxu0 0.0
      %1842 = vmatprep.subr.mxu0 0.0
      %1843 = vmatpush1.msra.mxu0 0.0
      %1844 = vmatprep.subr.mxu0 0.0
      %1845 = vmatpush1.msra.mxu0 0.0
      %1846 = vmatprep.subr.mxu0 0.0
      %1847 = vmatpush1.msra.mxu0 0.0
      %1848 = vmatprep.mubr.f32.mxu0 0.0
      %1849 = vmatmul.mubr.f32.gmra.mrb[0].mxu0 %v1782
      %v1850 = vpop.f32.mrb[0].mxu0
      %v1851 = vadd.f32 %v1780, %v1850
      %v1852 = vpop.f32.mrb[0].mxu0
      %1853 = vdwg.mxu0
      %v1854 = vadd.f32 %v1851, %v272
      %v1856 = vcombine.high %v1854, %v1854
      %v1858 = vunpack.c.l.s4 1966171168
      %v1859 = vunpack.c.0.s8 %v1858
      %v1860 = vlaneseq
      %v1861 = vshrl.u32 %v1860, 7
      %v1862 = vsub.s32 %v1859, %v1861
      %v1863 = vrot.slane %v1854, %v1862
      %v1865 = vunpack.c.l.s4 1966171168
      %v1866 = vunpack.c.0.s8 %v1865
      %v1867 = vlaneseq
      %v1868 = vshrl.u32 %v1867, 7
      %v1869 = vsub.s32 %v1866, %v1868
      %v1870 = vrot.slane %v1856, %v1869
      %v1871 = vcombine.high %v1863, %v1863
      %v1872 = vcombine.high %v1870, %v1870
      %v1874 = vunpack.c.l.s4 1966171168
      %v1875 = vunpack.c.0.s8 %v1874
      %v1876 = vlaneseq
      %v1877 = vshrl.u32 %v1876, 7
      %v1878 = vsub.s32 %v1875, %v1877
      %v1879 = vrot.slane %v1863, %v1878
      %v1881 = vunpack.c.l.s4 1966171168
      %v1882 = vunpack.c.0.s8 %v1881
      %v1883 = vlaneseq
      %v1884 = vshrl.u32 %v1883, 7
      %v1885 = vsub.s32 %v1882, %v1884
      %v1886 = vrot.slane %v1870, %v1885
      %v1888 = vunpack.c.l.s4 1966171168
      %v1889 = vunpack.c.0.s8 %v1888
      %v1890 = vlaneseq
      %v1891 = vshrl.u32 %v1890, 7
      %v1892 = vsub.s32 %v1889, %v1891
      %v1893 = vrot.slane %v1871, %v1892
      %v1895 = vunpack.c.l.s4 1966171168
      %v1896 = vunpack.c.0.s8 %v1895
      %v1897 = vlaneseq
      %v1898 = vshrl.u32 %v1897, 7
      %v1899 = vsub.s32 %v1896, %v1898
      %v1900 = vrot.slane %v1872, %v1899
      %v1901 = vcombine.high %v1879, %v1879
      %v1902 = vcombine.high %v1886, %v1886
      %v1903 = vcombine.high %v1893, %v1893
      %v1904 = vcombine.high %v1900, %v1900
      %v1905 = vcombine.low %v1879, %v1893
      %v1906 = vcombine.low %v1901, %v1903
      %v1907 = vcombine.low %v1886, %v1900
      %v1908 = vcombine.low %v1902, %v1904
      %v1910 = vunpack.c.l.s4 1966171168
      %v1911 = vunpack.c.0.s8 %v1910
      %v1912 = vlaneseq
      %v1913 = vshrl.u32 %v1912, 7
      %v1914 = vsub.s32 %v1911, %v1913
      %v1915 = vrot.slane %v1905, %v1914
      %v1917 = vunpack.c.l.s4 1966171168
      %v1918 = vunpack.c.0.s8 %v1917
      %v1919 = vlaneseq
      %v1920 = vshrl.u32 %v1919, 7
      %v1921 = vsub.s32 %v1918, %v1920
      %v1922 = vrot.slane %v1906, %v1921
      %v1924 = vunpack.c.l.s4 1966171168
      %v1925 = vunpack.c.0.s8 %v1924
      %v1926 = vlaneseq
      %v1927 = vshrl.u32 %v1926, 7
      %v1928 = vsub.s32 %v1925, %v1927
      %v1929 = vrot.slane %v1907, %v1928
      %v1931 = vunpack.c.l.s4 1966171168
      %v1932 = vunpack.c.0.s8 %v1931
      %v1933 = vlaneseq
      %v1934 = vshrl.u32 %v1933, 7
      %v1935 = vsub.s32 %v1932, %v1934
      %v1936 = vrot.slane %v1908, %v1935
      %v1937 = vcombine.low %v1915, %v1922
      %v1938 = vcombine.low %v1929, %v1936
      %v1940 = vunpack.c.l.s4 1966171168
      %v1941 = vunpack.c.0.s8 %v1940
      %v1942 = vlaneseq
      %v1943 = vshrl.u32 %v1942, 7
      %v1944 = vsub.s32 %v1941, %v1943
      %v1945 = vrot.slane %v1937, %v1944
      %v1947 = vunpack.c.l.s4 1966171168
      %v1948 = vunpack.c.0.s8 %v1947
      %v1949 = vlaneseq
      %v1950 = vshrl.u32 %v1949, 7
      %v1951 = vsub.s32 %v1948, %v1950
      %v1952 = vrot.slane %v1938, %v1951
      %v1953 = vcombine.low %v1945, %v1952
      %1955 = vst.msk [vmem:[%s192] sm:$0xff] %vm274, %v1953
      %p1956 = scmp.lt.s32.totalorder %s15, 1
      %s1957 = scalar_select %p1956, %s15, 1
      %s1958 = smul.addr %s1957, 8
      %s1959 = scalar_lea.vmem %s4, %s1958
      // Predicated region
      $region37: #{mha_block.1} parent=35 // pred_check
        %p1960 = pneg %p122
      $region38: #{mha_block.1} parent=35 // pred_check_branch
        %1962 = sbr.rel (%p1960) target = $region40
      $region39: #{mha_block.1} parent=35 // pred_region
        _
      $region40: #{mha_block.1} parent=35 // pred_fallthru
        _
    $region36: #{mha_block.1} parent=5 // pred_fallthru
      _
    %p1963 = scmp.le.s32.totalorder 2, %s10
    // Predicated region
    $region41: #{mha_block.1} parent=5 // pred_check
      %p1964 = pneg %p1963
    $region42: #{mha_block.1} parent=5 // pred_check_branch
      %1966 = sbr.rel (%p1964) target = $region44
    $region43: #{mha_block.1} parent=5 // pred_region
      %s1967 = ssub.s32 %s10, 2
      // Predicated region
      $region45: #{mha_block.1} parent=43 // pred_check
        %p1968 = pneg %p128
      $region46: #{mha_block.1} parent=43 // pred_check_branch
        %1970 = sbr.rel (%p1968) target = $region48
      $region47: #{mha_block.1} parent=43 // pred_region
        %p1971 = scmp.lt.s32.totalorder %s16, 1
        %s1972 = scalar_select %p1971, %s16, 1
        %s1973 = smul.addr %s1972, 8
        %s1974 = scalar_lea.vmem %s4, %s1973
      $region48: #{mha_block.1} parent=43 // pred_fallthru
        _
    $region44: #{mha_block.1} parent=5 // pred_fallthru
      _
  $region6: #{mha_block.1} parent=0 // loop_footer
    %s14 = sadd.s32 1, %s10
  $region7: #{mha_block.1} parent=0 // loop_footer_branch
    %9 = sbr.rel target = $region3
  $region8: #{mha_block.1} parent=0 // loop_exit
    _

</llo_original>
